<compile_context>
chip_gen: v5e
topology: v5e:2x2
jax: 0.10.0
libtpu: 0.0.40
codegen_flags: <defaults>
</compile_context>

<pallas_src>
import functools

import jax
import jax.numpy as jnp
from jax.experimental import pallas as pl
from jax.experimental.pallas import tpu as pltpu

_VMEM_LIMIT = 48 * 1024 * 1024          # headroom below v7x's 64 MiB physical VMEM
_TARGET_BLOCK_BYTES = 2 * 1024 * 1024   # ~2 MiB per input block (amortizes step cost)


# --------------------------------------------------------------------------
# channels_last: normalize over the last (lane) axis of a (rows, C) tile.
# --------------------------------------------------------------------------
def _ln_channels_last_kernel(x_ref, w_ref, b_ref, o_ref, *, eps, inv_c):
    x = x_ref[...].astype(jnp.float32)                 # (TM, C)
    s1 = jnp.sum(x, axis=-1, keepdims=True)            # (TM, 1)
    s2 = jnp.sum(x * x, axis=-1, keepdims=True)        # (TM, 1)
    mean = s1 * inv_c
    var = jnp.maximum(s2 * inv_c - mean * mean, 0.0)
    y = (x - mean) * jax.lax.rsqrt(var + eps)
    y = y * w_ref[...].astype(jnp.float32) + b_ref[...].astype(jnp.float32)
    o_ref[...] = y.astype(o_ref.dtype)


def layer_norm_channels_last(x, weight, bias, eps=1e-6, block_rows=None):
    """x: (..., C) -> LayerNorm over the last dim."""
    orig_shape = x.shape
    C = orig_shape[-1]
    x2 = x.reshape(-1, C)                              # free contiguous reshape
    N = x2.shape[0]
    itemsize = x2.dtype.itemsize

    # Pick tm so each block is ~_TARGET_BLOCK_BYTES (tm scales inversely with C).
    if block_rows is not None:
        tm = block_rows
    else:
        tm = _TARGET_BLOCK_BYTES // (C * itemsize)
    if tm >= N:
        tm = N                                         # full dim -> no alignment needed
    else:
        tm = min(max(8, (tm // 8) * 8), 4096)          # sublane-aligned, VMEM-safe cap

    n_tiles = pl.cdiv(N, tm)                           # ragged edge handled by Pallas
    w2 = weight.reshape(1, C)
    b2 = bias.reshape(1, C)

    out = pl.pallas_call(
        functools.partial(_ln_channels_last_kernel, eps=float(eps), inv_c=1.0 / C),
        out_shape=jax.ShapeDtypeStruct(x2.shape, x2.dtype),
        grid_spec=pltpu.PrefetchScalarGridSpec(
            num_scalar_prefetch=0,
            grid=(n_tiles,),
            in_specs=[
                pl.BlockSpec((tm, C), lambda i: (i, 0)),
                pl.BlockSpec((1, C), lambda i: (0, 0)),
                pl.BlockSpec((1, C), lambda i: (0, 0)),
            ],
            out_specs=pl.BlockSpec((tm, C), lambda i: (i, 0)),
        ),
        compiler_params=pltpu.CompilerParams(
            dimension_semantics=("parallel",),
            vmem_limit_bytes=_VMEM_LIMIT,
        ),
        cost_estimate=pl.CostEstimate(
            flops=8 * N * C,
            transcendentals=N,
            bytes_accessed=2 * N * C * itemsize,
        ),
    )(x2, w2, b2)
    return out.reshape(orig_shape)


# --------------------------------------------------------------------------
# channels_first: (B, C, H, W) -> normalize over the channel axis.
# Spatial dims fold onto the lane axis; reduction over C is a sublane/VALU
# reduction with no host-side transpose.  Large HW -> spatial tiling;
# small HW (late ConvNeXt stages) -> batch blocking to keep blocks ~2 MiB.
# --------------------------------------------------------------------------
def _ln_channels_first_kernel(x_ref, w_ref, b_ref, o_ref, *, eps, inv_c):
    x = x_ref[...].astype(jnp.float32)                 # (BB, C, TN)
    s1 = jnp.sum(x, axis=1, keepdims=True)             # (BB, 1, TN)
    s2 = jnp.sum(x * x, axis=1, keepdims=True)         # (BB, 1, TN)
    mean = s1 * inv_c
    var = jnp.maximum(s2 * inv_c - mean * mean, 0.0)
    y = (x - mean) * jax.lax.rsqrt(var + eps)
    w = w_ref[...].astype(jnp.float32)[None, :, :]     # (1, C, 1)
    b = b_ref[...].astype(jnp.float32)[None, :, :]     # (1, C, 1)
    o_ref[...] = (w * y + b).astype(o_ref.dtype)


def layer_norm_channels_first(x, weight, bias, eps=1e-6,
                              block_batch=None, block_cols=None):
    """x: (B, C, H, W) -> LayerNorm over dim 1 (channels)."""
    B, C, H, W = x.shape
    HW = H * W
    xf = x.reshape(B, C, HW)                           # free contiguous reshape
    itemsize = xf.dtype.itemsize

    # Spatial tile (lane axis): multiple of 128, or the full HW extent.
    if block_cols is not None:
        tn = block_cols
    else:
        tn = _TARGET_BLOCK_BYTES // (C * itemsize)
    if tn >= HW:
        tn = HW
    else:
        tn = max(128, (tn // 128) * 128)

    # Batch blocking only pays when the whole spatial extent fits in one tile.
    if block_batch is not None:
        bb = min(max(1, block_batch), B)
    elif tn == HW:
        bb = min(B, max(1, _TARGET_BLOCK_BYTES // max(1, C * HW * itemsize)))
    else:
        bb = 1

    nb = pl.cdiv(B, bb)
    nc = pl.cdiv(HW, tn)

    w2 = weight.reshape(C, 1)
    b2 = bias.reshape(C, 1)

    # Put the longer grid axis first so megacore sharding (v7x) stays balanced.
    if nc >= nb:
        grid = (nc, nb)
        x_map = lambda j, i: (i, 0, j)
    else:
        grid = (nb, nc)
        x_map = lambda i, j: (i, 0, j)
    wb_map = lambda a, b_: (0, 0)

    out = pl.pallas_call(
        functools.partial(_ln_channels_first_kernel, eps=float(eps), inv_c=1.0 / C),
        out_shape=jax.ShapeDtypeStruct(xf.shape, xf.dtype),
        grid_spec=pltpu.PrefetchScalarGridSpec(
            num_scalar_prefetch=0,
            grid=grid,
            in_specs=[
                pl.BlockSpec((bb, C, tn), x_map),
                pl.BlockSpec((C, 1), wb_map),
                pl.BlockSpec((C, 1), wb_map),
            ],
            out_specs=pl.BlockSpec((bb, C, tn), x_map),
        ),
        compiler_params=pltpu.CompilerParams(
            dimension_semantics=("parallel", "parallel"),
            vmem_limit_bytes=_VMEM_LIMIT,
        ),
        cost_estimate=pl.CostEstimate(
            flops=8 * B * C * HW,
            transcendentals=B * HW,
            bytes_accessed=2 * B * C * HW * itemsize,
        ),
    )(xf, w2, b2)
    return out.reshape(B, C, H, W)


def layer_norm(x, weight, bias, eps=1e-6, data_format="channels_last"):
    """Mirrors LayerNorm.forward from model_convnext.py."""
    if data_format == "channels_last":
        return layer_norm_channels_last(x, weight, bias, eps)
    elif data_format == "channels_first":
        return layer_norm_channels_first(x, weight, bias, eps)
    raise NotImplementedError(data_format)


# --------------------------------------------------------------------------
# Pure-JAX references (mirror the PyTorch forward) for verification.
# --------------------------------------------------------------------------
def _ref_channels_last(x, w, b, eps):
    mean = x.mean(-1, keepdims=True)
    var = ((x - mean) ** 2).mean(-1, keepdims=True)
    return (x - mean) / jnp.sqrt(var + eps) * w + b


def _ref_channels_first(x, w, b, eps):
    u = x.mean(1, keepdims=True)
    s = ((x - u) ** 2).mean(1, keepdims=True)
    xn = (x - u) / jnp.sqrt(s + eps)
    return w[None, :, None, None] * xn + b[None, :, None, None]


if __name__ == "__main__":
    key = jax.random.PRNGKey(0)
    k1, k2, k3, k4, k5, k6 = jax.random.split(key, 6)
    B, C, H, W = 2, 32, 16, 16
    eps = 1e-6

    weight = (1.0 + 0.1 * jax.random.normal(k3, (C,))).astype(jnp.float32)
    bias = (0.1 * jax.random.normal(k4, (C,))).astype(jnp.float32)

    # --- channels_last: (B, H, W, C) ---
    x_last = jax.random.normal(k1, (B, H, W, C), dtype=jnp.float32)
    out_last = jax.block_until_ready(
        layer_norm(x_last, weight, bias, eps, "channels_last"))
    ref_last = _ref_channels_last(x_last, weight, bias, eps)
    assert out_last.shape == x_last.shape
    assert jnp.allclose(out_last, ref_last, rtol=1e-4, atol=1e-4), (
        float(jnp.max(jnp.abs(out_last - ref_last))))

    # --- channels_first: (B, C, H, W) ---
    x_first = jax.random.normal(k2, (B, C, H, W), dtype=jnp.float32)
    out_first = jax.block_until_ready(
        layer_norm(x_first, weight, bias, eps, "channels_first"))
    ref_first = _ref_channels_first(x_first, weight, bias, eps)
    assert out_first.shape == x_first.shape
    assert jnp.allclose(out_first, ref_first, rtol=1e-4, atol=1e-4), (
        float(jnp.max(jnp.abs(out_first - ref_first))))

    # --- ragged-edge coverage (no host padding anywhere) ---
    # channels_last: 105 rows with a 64-row block -> masked edge block.
    x_rag = jax.random.normal(k5, (3, 5, 7, C), dtype=jnp.float32)
    out_rag = jax.block_until_ready(
        layer_norm_channels_last(x_rag, weight, bias, eps, block_rows=64))
    ref_rag = _ref_channels_last(x_rag, weight, bias, eps)
    assert jnp.allclose(out_rag, ref_rag, rtol=1e-4, atol=1e-4), (
        float(jnp.max(jnp.abs(out_rag - ref_rag))))

    # channels_first: HW=150 with a 128-lane block and batch blocking of 2 on B=3.
    x_rag2 = jax.random.normal(k6, (3, C, 10, 15), dtype=jnp.float32)
    out_rag2 = jax.block_until_ready(
        layer_norm_channels_first(x_rag2, weight, bias, eps,
                                  block_batch=2, block_cols=128))
    ref_rag2 = _ref_channels_first(x_rag2, weight, bias, eps)
    assert jnp.allclose(out_rag2, ref_rag2, rtol=1e-4, atol=1e-4), (
        float(jnp.max(jnp.abs(out_rag2 - ref_rag2))))

    print("KERNEL_OK")
</pallas_src>

<mosaic_0001>
module attributes {stable_mosaic.version = 11 : i64} {
  func.func @_ln_channels_last_kernel(%arg0: i32, %arg1: memref<512x32xf32, #tpu.memory_space<vmem>>, %arg2: memref<1x32xf32, #tpu.memory_space<vmem>>, %arg3: memref<1x32xf32, #tpu.memory_space<vmem>>, %arg4: memref<512x32xf32, #tpu.memory_space<vmem>>) attributes {dimension_semantics = [#tpu.dimension_semantics<parallel>], iteration_bounds = array<i64: 1>, scalar_prefetch = 0 : i64, scratch_operands = 0 : i64, tpu.core_type = #tpu.core_type<tc>, window_params = [{transform_indices = @transform_0, window_bounds = array<i64: 512, 32>}, {pipeline_mode = #tpu.pipeline_mode<synchronous>, transform_indices = @transform_1, window_bounds = array<i64: 1, 32>}, {pipeline_mode = #tpu.pipeline_mode<synchronous>, transform_indices = @transform_2, window_bounds = array<i64: 1, 32>}, {transform_indices = @transform_3, window_bounds = array<i64: 512, 32>}]} {
    %c0 = arith.constant 0 : index
    %c0_0 = arith.constant 0 : index
    %0 = vector.load %arg1[%c0, %c0_0] : memref<512x32xf32, #tpu.memory_space<vmem>>, vector<512x32xf32>
    %cst = arith.constant dense<0.000000e+00> : vector<512xf32>
    %1 = vector.multi_reduction <add>, %0, %cst [1] : vector<512x32xf32> to vector<512xf32>
    %2 = vector.shape_cast %1 : vector<512xf32> to vector<512x1xf32>
    %3 = arith.mulf %0, %0 : vector<512x32xf32>
    %cst_1 = arith.constant dense<0.000000e+00> : vector<512xf32>
    %4 = vector.multi_reduction <add>, %3, %cst_1 [1] : vector<512x32xf32> to vector<512xf32>
    %5 = vector.shape_cast %4 : vector<512xf32> to vector<512x1xf32>
    %cst_2 = arith.constant 3.125000e-02 : f32
    %6 = vector.broadcast %cst_2 : f32 to vector<512x1xf32>
    %7 = arith.mulf %2, %6 : vector<512x1xf32>
    %cst_3 = arith.constant 3.125000e-02 : f32
    %8 = vector.broadcast %cst_3 : f32 to vector<512x1xf32>
    %9 = arith.mulf %5, %8 : vector<512x1xf32>
    %10 = arith.mulf %7, %7 : vector<512x1xf32>
    %11 = arith.subf %9, %10 : vector<512x1xf32>
    %cst_4 = arith.constant 0.000000e+00 : f32
    %12 = vector.broadcast %cst_4 : f32 to vector<512x1xf32>
    %13 = arith.maximumf %11, %12 : vector<512x1xf32>
    %14 = vector.broadcast %7 : vector<512x1xf32> to vector<512x32xf32>
    %15 = arith.subf %0, %14 : vector<512x32xf32>
    %cst_5 = arith.constant 9.99999997E-7 : f32
    %16 = vector.broadcast %cst_5 : f32 to vector<512x1xf32>
    %17 = arith.addf %13, %16 : vector<512x1xf32>
    %18 = math.rsqrt %17 : vector<512x1xf32>
    %19 = vector.broadcast %18 : vector<512x1xf32> to vector<512x32xf32>
    %20 = arith.mulf %15, %19 : vector<512x32xf32>
    %c0_6 = arith.constant 0 : index
    %c0_7 = arith.constant 0 : index
    %21 = vector.load %arg2[%c0_6, %c0_7] : memref<1x32xf32, #tpu.memory_space<vmem>>, vector<1x32xf32>
    %22 = vector.broadcast %21 : vector<1x32xf32> to vector<512x32xf32>
    %23 = arith.mulf %20, %22 : vector<512x32xf32>
    %c0_8 = arith.constant 0 : index
    %c0_9 = arith.constant 0 : index
    %24 = vector.load %arg3[%c0_8, %c0_9] : memref<1x32xf32, #tpu.memory_space<vmem>>, vector<1x32xf32>
    %25 = vector.broadcast %24 : vector<1x32xf32> to vector<512x32xf32>
    %26 = arith.addf %23, %25 : vector<512x32xf32>
    %c0_10 = arith.constant 0 : index
    %c0_11 = arith.constant 0 : index
    %27 = vector.load %arg4[%c0_10, %c0_11] : memref<512x32xf32, #tpu.memory_space<vmem>>, vector<512x32xf32>
    tpu.vector_store %arg4[%c0_10, %c0_11], %26 {strides = array<i32>} : memref<512x32xf32, #tpu.memory_space<vmem>>, vector<512x32xf32>,
    return
  }
  func.func @transform_0(%arg0: i32) -> (i32, i32) {
    %c0_i32 = arith.constant 0 : i32
    %c0_i32_0 = arith.constant 0 : i32
    return %arg0, %c0_i32 : i32, i32
  }
  func.func @transform_1(%arg0: i32) -> (i32, i32) {
    %c0_i32 = arith.constant 0 : i32
    %c0_i32_0 = arith.constant 0 : i32
    %c0_i32_1 = arith.constant 0 : i32
    return %c0_i32, %c0_i32_0 : i32, i32
  }
  func.func @transform_2(%arg0: i32) -> (i32, i32) {
    %c0_i32 = arith.constant 0 : i32
    %c0_i32_0 = arith.constant 0 : i32
    %c0_i32_1 = arith.constant 0 : i32
    return %c0_i32, %c0_i32_0 : i32, i32
  }
  func.func @transform_3(%arg0: i32) -> (i32, i32) {
    %c0_i32 = arith.constant 0 : i32
    %c0_i32_0 = arith.constant 0 : i32
    return %arg0, %c0_i32 : i32, i32
  }
}

</mosaic_0001>

<llo_original>
// kernel: tpu_custom_call.1
$region0: #{tpu_custom_call.1}
  #allocation0 [shape = 'u32[]', space=smem, size = 0x4, offset = 0x4, fixed_abs, tag = 'smem constant byte address 0x4 - core index']
  #allocation1 [shape = 'u32[72,128]{1,0:T(1,128)}', space=vmem, size = 0x9000, scoped, tag = 'internal scratch']
  %s0 = inlined_call_operand.vmem [shape: f32[512,32], index: 0, kind: input, shape index: {}]
  %s1 = inlined_call_operand.vmem [shape: f32[1,32], index: 1, kind: input, shape index: {}]
  %s2 = inlined_call_operand.vmem [shape: f32[1,32], index: 2, kind: input, shape index: {}]
  %s3 = inlined_call_operand.vmem [shape: f32[512,32], index: 3, kind: output, shape index: {}]
  %s4 = sld [smem:[#allocation0]]
  $region22: #{tpu_custom_call.1} parent=0
    _
  %s6 = ssub.s32 1, %s4
  %s7 = scalar_select 0, %s6, %s4
  // Predicated region
  $region2: #{tpu_custom_call.1} parent=0 // pred_check
    _
  $region3: #{tpu_custom_call.1} parent=0 // pred_check_branch
    %9 = sbr.rel (0) target = $region5
  $region4: #{tpu_custom_call.1} parent=0 // pred_region
    _
  $region5: #{tpu_custom_call.1} parent=0 // pred_fallthru
    _
  // Predicated region
  $region6: #{tpu_custom_call.1} parent=0 // pred_check
    _
  $region7: #{tpu_custom_call.1} parent=0 // pred_check_branch
    %11 = sbr.rel (0) target = $region9
  $region8: #{tpu_custom_call.1} parent=0 // pred_region
    _
  $region9: #{tpu_custom_call.1} parent=0 // pred_fallthru
    _
  // Predicated region
  $region10: #{tpu_custom_call.1} parent=0 // pred_check
    _
  $region11: #{tpu_custom_call.1} parent=0 // pred_check_branch
    %13 = sbr.rel (0) target = $region13
  $region12: #{tpu_custom_call.1} parent=0 // pred_region
    _
  $region13: #{tpu_custom_call.1} parent=0 // pred_fallthru
    _
  %v14 = vld [vmem:[%s0] sm:$0xff]
  %v15 = vld [vmem:[%s0 + $0x8] sm:$0xff]
  %v16 = vld [vmem:[%s0 + $0x10] sm:$0xff]
  %v17 = vld [vmem:[%s0 + $0x18] sm:$0xff]
  %v18 = vld [vmem:[%s0 + $0x20] sm:$0xff]
  %v19 = vld [vmem:[%s0 + $0x28] sm:$0xff]
  %v20 = vld [vmem:[%s0 + $0x30] sm:$0xff]
  %v21 = vld [vmem:[%s0 + $0x38] sm:$0xff]
  %v22 = vld [vmem:[%s0 + $0x40] sm:$0xff]
  %v23 = vld [vmem:[%s0 + $0x48] sm:$0xff]
  %v24 = vld [vmem:[%s0 + $0x50] sm:$0xff]
  %v25 = vld [vmem:[%s0 + $0x58] sm:$0xff]
  %v26 = vld [vmem:[%s0 + $0x60] sm:$0xff]
  %v27 = vld [vmem:[%s0 + $0x68] sm:$0xff]
  %v28 = vld [vmem:[%s0 + $0x70] sm:$0xff]
  %v29 = vld [vmem:[%s0 + $0x78] sm:$0xff]
  %v30 = vld [vmem:[%s0 + $0x80] sm:$0xff]
  %v31 = vld [vmem:[%s0 + $0x88] sm:$0xff]
  %v32 = vld [vmem:[%s0 + $0x90] sm:$0xff]
  %v33 = vld [vmem:[%s0 + $0x98] sm:$0xff]
  %v34 = vld [vmem:[%s0 + $0xa0] sm:$0xff]
  %v35 = vld [vmem:[%s0 + $0xa8] sm:$0xff]
  %v36 = vld [vmem:[%s0 + $0xb0] sm:$0xff]
  %v37 = vld [vmem:[%s0 + $0xb8] sm:$0xff]
  %v38 = vld [vmem:[%s0 + $0xc0] sm:$0xff]
  %v39 = vld [vmem:[%s0 + $0xc8] sm:$0xff]
  %v40 = vld [vmem:[%s0 + $0xd0] sm:$0xff]
  %v41 = vld [vmem:[%s0 + $0xd8] sm:$0xff]
  %v42 = vld [vmem:[%s0 + $0xe0] sm:$0xff]
  %v43 = vld [vmem:[%s0 + $0xe8] sm:$0xff]
  %v44 = vld [vmem:[%s0 + $0xf0] sm:$0xff]
  %v45 = vld [vmem:[%s0 + $0xf8] sm:$0xff]
  %v46 = vld [vmem:[%s0 + $0x100] sm:$0xff]
  %v47 = vld [vmem:[%s0 + $0x108] sm:$0xff]
  %v48 = vld [vmem:[%s0 + $0x110] sm:$0xff]
  %v49 = vld [vmem:[%s0 + $0x118] sm:$0xff]
  %v50 = vld [vmem:[%s0 + $0x120] sm:$0xff]
  %v51 = vld [vmem:[%s0 + $0x128] sm:$0xff]
  %v52 = vld [vmem:[%s0 + $0x130] sm:$0xff]
  %v53 = vld [vmem:[%s0 + $0x138] sm:$0xff]
  %v54 = vld [vmem:[%s0 + $0x140] sm:$0xff]
  %v55 = vld [vmem:[%s0 + $0x148] sm:$0xff]
  %v56 = vld [vmem:[%s0 + $0x150] sm:$0xff]
  %v57 = vld [vmem:[%s0 + $0x158] sm:$0xff]
  %v58 = vld [vmem:[%s0 + $0x160] sm:$0xff]
  %v59 = vld [vmem:[%s0 + $0x168] sm:$0xff]
  %v60 = vld [vmem:[%s0 + $0x170] sm:$0xff]
  %v61 = vld [vmem:[%s0 + $0x178] sm:$0xff]
  %v62 = vld [vmem:[%s0 + $0x180] sm:$0xff]
  %v63 = vld [vmem:[%s0 + $0x188] sm:$0xff]
  %v64 = vld [vmem:[%s0 + $0x190] sm:$0xff]
  %v65 = vld [vmem:[%s0 + $0x198] sm:$0xff]
  %v66 = vld [vmem:[%s0 + $0x1a0] sm:$0xff]
  %v67 = vld [vmem:[%s0 + $0x1a8] sm:$0xff]
  %v68 = vld [vmem:[%s0 + $0x1b0] sm:$0xff]
  %v69 = vld [vmem:[%s0 + $0x1b8] sm:$0xff]
  %v70 = vld [vmem:[%s0 + $0x1c0] sm:$0xff]
  %v71 = vld [vmem:[%s0 + $0x1c8] sm:$0xff]
  %v72 = vld [vmem:[%s0 + $0x1d0] sm:$0xff]
  %v73 = vld [vmem:[%s0 + $0x1d8] sm:$0xff]
  %v74 = vld [vmem:[%s0 + $0x1e0] sm:$0xff]
  %v75 = vld [vmem:[%s0 + $0x1e8] sm:$0xff]
  %v76 = vld [vmem:[%s0 + $0x1f0] sm:$0xff]
  %v77 = vld [vmem:[%s0 + $0x1f8] sm:$0xff]
  %vm78 = vcmask 261120
  %v79 = vsel %vm78, %v14, 0.0
  %80 = vadd.xlane.f32.xlu0 %v79
  %v81 = vpop.xlane.xlu0 %80
  %v82 = vsel %vm78, %v15, 0.0
  %83 = vadd.xlane.f32.xlu0 %v82
  %v84 = vpop.xlane.xlu0 %83
  %v85 = vsel %vm78, %v16, 0.0
  %86 = vadd.xlane.f32.xlu0 %v85
  %v87 = vpop.xlane.xlu0 %86
  %v88 = vsel %vm78, %v17, 0.0
  %89 = vadd.xlane.f32.xlu0 %v88
  %v90 = vpop.xlane.xlu0 %89
  %v91 = vsel %vm78, %v18, 0.0
  %92 = vadd.xlane.f32.xlu0 %v91
  %v93 = vpop.xlane.xlu0 %92
  %v94 = vsel %vm78, %v19, 0.0
  %95 = vadd.xlane.f32.xlu0 %v94
  %v96 = vpop.xlane.xlu0 %95
  %v97 = vsel %vm78, %v20, 0.0
  %98 = vadd.xlane.f32.xlu0 %v97
  %v99 = vpop.xlane.xlu0 %98
  %v100 = vsel %vm78, %v21, 0.0
  %101 = vadd.xlane.f32.xlu0 %v100
  %v102 = vpop.xlane.xlu0 %101
  %v103 = vsel %vm78, %v22, 0.0
  %104 = vadd.xlane.f32.xlu0 %v103
  %v105 = vpop.xlane.xlu0 %104
  %v106 = vsel %vm78, %v23, 0.0
  %107 = vadd.xlane.f32.xlu0 %v106
  %v108 = vpop.xlane.xlu0 %107
  %v109 = vsel %vm78, %v24, 0.0
  %110 = vadd.xlane.f32.xlu0 %v109
  %v111 = vpop.xlane.xlu0 %110
  %v112 = vsel %vm78, %v25, 0.0
  %113 = vadd.xlane.f32.xlu0 %v112
  %v114 = vpop.xlane.xlu0 %113
  %v115 = vsel %vm78, %v26, 0.0
  %116 = vadd.xlane.f32.xlu0 %v115
  %v117 = vpop.xlane.xlu0 %116
  %v118 = vsel %vm78, %v27, 0.0
  %119 = vadd.xlane.f32.xlu0 %v118
  %v120 = vpop.xlane.xlu0 %119
  %v121 = vsel %vm78, %v28, 0.0
  %122 = vadd.xlane.f32.xlu0 %v121
  %v123 = vpop.xlane.xlu0 %122
  %v124 = vsel %vm78, %v29, 0.0
  %125 = vadd.xlane.f32.xlu0 %v124
  %v126 = vpop.xlane.xlu0 %125
  %v127 = vsel %vm78, %v30, 0.0
  %128 = vadd.xlane.f32.xlu0 %v127
  %v129 = vpop.xlane.xlu0 %128
  %v130 = vsel %vm78, %v31, 0.0
  %131 = vadd.xlane.f32.xlu0 %v130
  %v132 = vpop.xlane.xlu0 %131
  %v133 = vsel %vm78, %v32, 0.0
  %134 = vadd.xlane.f32.xlu0 %v133
  %v135 = vpop.xlane.xlu0 %134
  %v136 = vsel %vm78, %v33, 0.0
  %137 = vadd.xlane.f32.xlu0 %v136
  %v138 = vpop.xlane.xlu0 %137
  %v139 = vsel %vm78, %v34, 0.0
  %140 = vadd.xlane.f32.xlu0 %v139
  %v141 = vpop.xlane.xlu0 %140
  %v142 = vsel %vm78, %v35, 0.0
  %143 = vadd.xlane.f32.xlu0 %v142
  %v144 = vpop.xlane.xlu0 %143
  %v145 = vsel %vm78, %v36, 0.0
  %146 = vadd.xlane.f32.xlu0 %v145
  %v147 = vpop.xlane.xlu0 %146
  %v148 = vsel %vm78, %v37, 0.0
  %149 = vadd.xlane.f32.xlu0 %v148
  %v150 = vpop.xlane.xlu0 %149
  %v151 = vsel %vm78, %v38, 0.0
  %152 = vadd.xlane.f32.xlu0 %v151
  %v153 = vpop.xlane.xlu0 %152
  %v154 = vsel %vm78, %v39, 0.0
  %155 = vadd.xlane.f32.xlu0 %v154
  %v156 = vpop.xlane.xlu0 %155
  %v157 = vsel %vm78, %v40, 0.0
  %158 = vadd.xlane.f32.xlu0 %v157
  %v159 = vpop.xlane.xlu0 %158
  %v160 = vsel %vm78, %v41, 0.0
  %161 = vadd.xlane.f32.xlu0 %v160
  %v162 = vpop.xlane.xlu0 %161
  %v163 = vsel %vm78, %v42, 0.0
  %164 = vadd.xlane.f32.xlu0 %v163
  %v165 = vpop.xlane.xlu0 %164
  %v166 = vsel %vm78, %v43, 0.0
  %167 = vadd.xlane.f32.xlu0 %v166
  %v168 = vpop.xlane.xlu0 %167
  %v169 = vsel %vm78, %v44, 0.0
  %170 = vadd.xlane.f32.xlu0 %v169
  %v171 = vpop.xlane.xlu0 %170
  %v172 = vsel %vm78, %v45, 0.0
  %173 = vadd.xlane.f32.xlu0 %v172
  %v174 = vpop.xlane.xlu0 %173
  %v175 = vsel %vm78, %v46, 0.0
  %176 = vadd.xlane.f32.xlu0 %v175
  %v177 = vpop.xlane.xlu0 %176
  %v178 = vsel %vm78, %v47, 0.0
  %179 = vadd.xlane.f32.xlu0 %v178
  %v180 = vpop.xlane.xlu0 %179
  %v181 = vsel %vm78, %v48, 0.0
  %182 = vadd.xlane.f32.xlu0 %v181
  %v183 = vpop.xlane.xlu0 %182
  %v184 = vsel %vm78, %v49, 0.0
  %185 = vadd.xlane.f32.xlu0 %v184
  %v186 = vpop.xlane.xlu0 %185
  %v187 = vsel %vm78, %v50, 0.0
  %188 = vadd.xlane.f32.xlu0 %v187
  %v189 = vpop.xlane.xlu0 %188
  %v190 = vsel %vm78, %v51, 0.0
  %191 = vadd.xlane.f32.xlu0 %v190
  %v192 = vpop.xlane.xlu0 %191
  %v193 = vsel %vm78, %v52, 0.0
  %194 = vadd.xlane.f32.xlu0 %v193
  %v195 = vpop.xlane.xlu0 %194
  %v196 = vsel %vm78, %v53, 0.0
  %197 = vadd.xlane.f32.xlu0 %v196
  %v198 = vpop.xlane.xlu0 %197
  %v199 = vsel %vm78, %v54, 0.0
  %200 = vadd.xlane.f32.xlu0 %v199
  %v201 = vpop.xlane.xlu0 %200
  %v202 = vsel %vm78, %v55, 0.0
  %203 = vadd.xlane.f32.xlu0 %v202
  %v204 = vpop.xlane.xlu0 %203
  %v205 = vsel %vm78, %v56, 0.0
  %206 = vadd.xlane.f32.xlu0 %v205
  %v207 = vpop.xlane.xlu0 %206
  %v208 = vsel %vm78, %v57, 0.0
  %209 = vadd.xlane.f32.xlu0 %v208
  %v210 = vpop.xlane.xlu0 %209
  %v211 = vsel %vm78, %v58, 0.0
  %212 = vadd.xlane.f32.xlu0 %v211
  %v213 = vpop.xlane.xlu0 %212
  %v214 = vsel %vm78, %v59, 0.0
  %215 = vadd.xlane.f32.xlu0 %v214
  %v216 = vpop.xlane.xlu0 %215
  %v217 = vsel %vm78, %v60, 0.0
  %218 = vadd.xlane.f32.xlu0 %v217
  %v219 = vpop.xlane.xlu0 %218
  %v220 = vsel %vm78, %v61, 0.0
  %221 = vadd.xlane.f32.xlu0 %v220
  %v222 = vpop.xlane.xlu0 %221
  %v223 = vsel %vm78, %v62, 0.0
  %224 = vadd.xlane.f32.xlu0 %v223
  %v225 = vpop.xlane.xlu0 %224
  %v226 = vsel %vm78, %v63, 0.0
  %227 = vadd.xlane.f32.xlu0 %v226
  %v228 = vpop.xlane.xlu0 %227
  %v229 = vsel %vm78, %v64, 0.0
  %230 = vadd.xlane.f32.xlu0 %v229
  %v231 = vpop.xlane.xlu0 %230
  %v232 = vsel %vm78, %v65, 0.0
  %233 = vadd.xlane.f32.xlu0 %v232
  %v234 = vpop.xlane.xlu0 %233
  %v235 = vsel %vm78, %v66, 0.0
  %236 = vadd.xlane.f32.xlu0 %v235
  %v237 = vpop.xlane.xlu0 %236
  %v238 = vsel %vm78, %v67, 0.0
  %239 = vadd.xlane.f32.xlu0 %v238
  %v240 = vpop.xlane.xlu0 %239
  %v241 = vsel %vm78, %v68, 0.0
  %242 = vadd.xlane.f32.xlu0 %v241
  %v243 = vpop.xlane.xlu0 %242
  %v244 = vsel %vm78, %v69, 0.0
  %245 = vadd.xlane.f32.xlu0 %v244
  %v246 = vpop.xlane.xlu0 %245
  %v247 = vsel %vm78, %v70, 0.0
  %248 = vadd.xlane.f32.xlu0 %v247
  %v249 = vpop.xlane.xlu0 %248
  %v250 = vsel %vm78, %v71, 0.0
  %251 = vadd.xlane.f32.xlu0 %v250
  %v252 = vpop.xlane.xlu0 %251
  %v253 = vsel %vm78, %v72, 0.0
  %254 = vadd.xlane.f32.xlu0 %v253
  %v255 = vpop.xlane.xlu0 %254
  %v256 = vsel %vm78, %v73, 0.0
  %257 = vadd.xlane.f32.xlu0 %v256
  %v258 = vpop.xlane.xlu0 %257
  %v259 = vsel %vm78, %v74, 0.0
  %260 = vadd.xlane.f32.xlu0 %v259
  %v261 = vpop.xlane.xlu0 %260
  %v262 = vsel %vm78, %v75, 0.0
  %263 = vadd.xlane.f32.xlu0 %v262
  %v264 = vpop.xlane.xlu0 %263
  %v265 = vsel %vm78, %v76, 0.0
  %266 = vadd.xlane.f32.xlu0 %v265
  %v267 = vpop.xlane.xlu0 %266
  %v268 = vsel %vm78, %v77, 0.0
  %269 = vadd.xlane.f32.xlu0 %v268
  %v270 = vpop.xlane.xlu0 %269
  %v271 = vmul.f32 %v14, %v14
  %v272 = vmul.f32 %v15, %v15
  %v273 = vmul.f32 %v16, %v16
  %v274 = vmul.f32 %v17, %v17
  %v275 = vmul.f32 %v18, %v18
  %v276 = vmul.f32 %v19, %v19
  %v277 = vmul.f32 %v20, %v20
  %v278 = vmul.f32 %v21, %v21
  %v279 = vmul.f32 %v22, %v22
  %v280 = vmul.f32 %v23, %v23
  %v281 = vmul.f32 %v24, %v24
  %v282 = vmul.f32 %v25, %v25
  %v283 = vmul.f32 %v26, %v26
  %v284 = vmul.f32 %v27, %v27
  %v285 = vmul.f32 %v28, %v28
  %v286 = vmul.f32 %v29, %v29
  %v287 = vmul.f32 %v30, %v30
  %v288 = vmul.f32 %v31, %v31
  %v289 = vmul.f32 %v32, %v32
  %v290 = vmul.f32 %v33, %v33
  %v291 = vmul.f32 %v34, %v34
  %v292 = vmul.f32 %v35, %v35
  %v293 = vmul.f32 %v36, %v36
  %v294 = vmul.f32 %v37, %v37
  %v295 = vmul.f32 %v38, %v38
  %v296 = vmul.f32 %v39, %v39
  %v297 = vmul.f32 %v40, %v40
  %v298 = vmul.f32 %v41, %v41
  %v299 = vmul.f32 %v42, %v42
  %v300 = vmul.f32 %v43, %v43
  %v301 = vmul.f32 %v44, %v44
  %v302 = vmul.f32 %v45, %v45
  %v303 = vmul.f32 %v46, %v46
  %v304 = vmul.f32 %v47, %v47
  %v305 = vmul.f32 %v48, %v48
  %v306 = vmul.f32 %v49, %v49
  %v307 = vmul.f32 %v50, %v50
  %v308 = vmul.f32 %v51, %v51
  %v309 = vmul.f32 %v52, %v52
  %v310 = vmul.f32 %v53, %v53
  %v311 = vmul.f32 %v54, %v54
  %v312 = vmul.f32 %v55, %v55
  %v313 = vmul.f32 %v56, %v56
  %v314 = vmul.f32 %v57, %v57
  %v315 = vmul.f32 %v58, %v58
  %v316 = vmul.f32 %v59, %v59
  %v317 = vmul.f32 %v60, %v60
  %v318 = vmul.f32 %v61, %v61
  %v319 = vmul.f32 %v62, %v62
  %v320 = vmul.f32 %v63, %v63
  %v321 = vmul.f32 %v64, %v64
  %v322 = vmul.f32 %v65, %v65
  %v323 = vmul.f32 %v66, %v66
  %v324 = vmul.f32 %v67, %v67
  %v325 = vmul.f32 %v68, %v68
  %v326 = vmul.f32 %v69, %v69
  %v327 = vmul.f32 %v70, %v70
  %v328 = vmul.f32 %v71, %v71
  %v329 = vmul.f32 %v72, %v72
  %v330 = vmul.f32 %v73, %v73
  %v331 = vmul.f32 %v74, %v74
  %v332 = vmul.f32 %v75, %v75
  %v333 = vmul.f32 %v76, %v76
  %v334 = vmul.f32 %v77, %v77
  %v335 = vsel %vm78, %v271, 0.0
  %336 = vadd.xlane.f32.xlu0 %v335
  %v337 = vpop.xlane.xlu0 %336
  %v338 = vsel %vm78, %v272, 0.0
  %339 = vadd.xlane.f32.xlu0 %v338
  %v340 = vpop.xlane.xlu0 %339
  %v341 = vsel %vm78, %v273, 0.0
  %342 = vadd.xlane.f32.xlu0 %v341
  %v343 = vpop.xlane.xlu0 %342
  %v344 = vsel %vm78, %v274, 0.0
  %345 = vadd.xlane.f32.xlu0 %v344
  %v346 = vpop.xlane.xlu0 %345
  %v347 = vsel %vm78, %v275, 0.0
  %348 = vadd.xlane.f32.xlu0 %v347
  %v349 = vpop.xlane.xlu0 %348
  %v350 = vsel %vm78, %v276, 0.0
  %351 = vadd.xlane.f32.xlu0 %v350
  %v352 = vpop.xlane.xlu0 %351
  %v353 = vsel %vm78, %v277, 0.0
  %354 = vadd.xlane.f32.xlu0 %v353
  %v355 = vpop.xlane.xlu0 %354
  %v356 = vsel %vm78, %v278, 0.0
  %357 = vadd.xlane.f32.xlu0 %v356
  %v358 = vpop.xlane.xlu0 %357
  %v359 = vsel %vm78, %v279, 0.0
  %360 = vadd.xlane.f32.xlu0 %v359
  %v361 = vpop.xlane.xlu0 %360
  %v362 = vsel %vm78, %v280, 0.0
  %363 = vadd.xlane.f32.xlu0 %v362
  %v364 = vpop.xlane.xlu0 %363
  %v365 = vsel %vm78, %v281, 0.0
  %366 = vadd.xlane.f32.xlu0 %v365
  %v367 = vpop.xlane.xlu0 %366
  %v368 = vsel %vm78, %v282, 0.0
  %369 = vadd.xlane.f32.xlu0 %v368
  %v370 = vpop.xlane.xlu0 %369
  %v371 = vsel %vm78, %v283, 0.0
  %372 = vadd.xlane.f32.xlu0 %v371
  %v373 = vpop.xlane.xlu0 %372
  %v374 = vsel %vm78, %v284, 0.0
  %375 = vadd.xlane.f32.xlu0 %v374
  %v376 = vpop.xlane.xlu0 %375
  %v377 = vsel %vm78, %v285, 0.0
  %378 = vadd.xlane.f32.xlu0 %v377
  %v379 = vpop.xlane.xlu0 %378
  %v380 = vsel %vm78, %v286, 0.0
  %381 = vadd.xlane.f32.xlu0 %v380
  %v382 = vpop.xlane.xlu0 %381
  %v383 = vsel %vm78, %v287, 0.0
  %384 = vadd.xlane.f32.xlu0 %v383
  %v385 = vpop.xlane.xlu0 %384
  %v386 = vsel %vm78, %v288, 0.0
  %387 = vadd.xlane.f32.xlu0 %v386
  %v388 = vpop.xlane.xlu0 %387
  %v389 = vsel %vm78, %v289, 0.0
  %390 = vadd.xlane.f32.xlu0 %v389
  %v391 = vpop.xlane.xlu0 %390
  %v392 = vsel %vm78, %v290, 0.0
  %393 = vadd.xlane.f32.xlu0 %v392
  %v394 = vpop.xlane.xlu0 %393
  %v395 = vsel %vm78, %v291, 0.0
  %396 = vadd.xlane.f32.xlu0 %v395
  %v397 = vpop.xlane.xlu0 %396
  %v398 = vsel %vm78, %v292, 0.0
  %399 = vadd.xlane.f32.xlu0 %v398
  %v400 = vpop.xlane.xlu0 %399
  %v401 = vsel %vm78, %v293, 0.0
  %402 = vadd.xlane.f32.xlu0 %v401
  %v403 = vpop.xlane.xlu0 %402
  %v404 = vsel %vm78, %v294, 0.0
  %405 = vadd.xlane.f32.xlu0 %v404
  %v406 = vpop.xlane.xlu0 %405
  %v407 = vsel %vm78, %v295, 0.0
  %408 = vadd.xlane.f32.xlu0 %v407
  %v409 = vpop.xlane.xlu0 %408
  %v410 = vsel %vm78, %v296, 0.0
  %411 = vadd.xlane.f32.xlu0 %v410
  %v412 = vpop.xlane.xlu0 %411
  %v413 = vsel %vm78, %v297, 0.0
  %414 = vadd.xlane.f32.xlu0 %v413
  %v415 = vpop.xlane.xlu0 %414
  %v416 = vsel %vm78, %v298, 0.0
  %417 = vadd.xlane.f32.xlu0 %v416
  %v418 = vpop.xlane.xlu0 %417
  %v419 = vsel %vm78, %v299, 0.0
  %420 = vadd.xlane.f32.xlu0 %v419
  %v421 = vpop.xlane.xlu0 %420
  %v422 = vsel %vm78, %v300, 0.0
  %423 = vadd.xlane.f32.xlu0 %v422
  %v424 = vpop.xlane.xlu0 %423
  %v425 = vsel %vm78, %v301, 0.0
  %426 = vadd.xlane.f32.xlu0 %v425
  %v427 = vpop.xlane.xlu0 %426
  %v428 = vsel %vm78, %v302, 0.0
  %429 = vadd.xlane.f32.xlu0 %v428
  %v430 = vpop.xlane.xlu0 %429
  %v431 = vsel %vm78, %v303, 0.0
  %432 = vadd.xlane.f32.xlu0 %v431
  %v433 = vpop.xlane.xlu0 %432
  %v434 = vsel %vm78, %v304, 0.0
  %435 = vadd.xlane.f32.xlu0 %v434
  %v436 = vpop.xlane.xlu0 %435
  %v437 = vsel %vm78, %v305, 0.0
  %438 = vadd.xlane.f32.xlu0 %v437
  %v439 = vpop.xlane.xlu0 %438
  %v440 = vsel %vm78, %v306, 0.0
  %441 = vadd.xlane.f32.xlu0 %v440
  %v442 = vpop.xlane.xlu0 %441
  %v443 = vsel %vm78, %v307, 0.0
  %444 = vadd.xlane.f32.xlu0 %v443
  %v445 = vpop.xlane.xlu0 %444
  %v446 = vsel %vm78, %v308, 0.0
  %447 = vadd.xlane.f32.xlu0 %v446
  %v448 = vpop.xlane.xlu0 %447
  %v449 = vsel %vm78, %v309, 0.0
  %450 = vadd.xlane.f32.xlu0 %v449
  %v451 = vpop.xlane.xlu0 %450
  %v452 = vsel %vm78, %v310, 0.0
  %453 = vadd.xlane.f32.xlu0 %v452
  %v454 = vpop.xlane.xlu0 %453
  %v455 = vsel %vm78, %v311, 0.0
  %456 = vadd.xlane.f32.xlu0 %v455
  %v457 = vpop.xlane.xlu0 %456
  %v458 = vsel %vm78, %v312, 0.0
  %459 = vadd.xlane.f32.xlu0 %v458
  %v460 = vpop.xlane.xlu0 %459
  %v461 = vsel %vm78, %v313, 0.0
  %462 = vadd.xlane.f32.xlu0 %v461
  %v463 = vpop.xlane.xlu0 %462
  %v464 = vsel %vm78, %v314, 0.0
  %465 = vadd.xlane.f32.xlu0 %v464
  %v466 = vpop.xlane.xlu0 %465
  %v467 = vsel %vm78, %v315, 0.0
  %468 = vadd.xlane.f32.xlu0 %v467
  %v469 = vpop.xlane.xlu0 %468
  %v470 = vsel %vm78, %v316, 0.0
  %471 = vadd.xlane.f32.xlu0 %v470
  %v472 = vpop.xlane.xlu0 %471
  %v473 = vsel %vm78, %v317, 0.0
  %474 = vadd.xlane.f32.xlu0 %v473
  %v475 = vpop.xlane.xlu0 %474
  %v476 = vsel %vm78, %v318, 0.0
  %477 = vadd.xlane.f32.xlu0 %v476
  %v478 = vpop.xlane.xlu0 %477
  %v479 = vsel %vm78, %v319, 0.0
  %480 = vadd.xlane.f32.xlu0 %v479
  %v481 = vpop.xlane.xlu0 %480
  %v482 = vsel %vm78, %v320, 0.0
  %483 = vadd.xlane.f32.xlu0 %v482
  %v484 = vpop.xlane.xlu0 %483
  %v485 = vsel %vm78, %v321, 0.0
  %486 = vadd.xlane.f32.xlu0 %v485
  %v487 = vpop.xlane.xlu0 %486
  %v488 = vsel %vm78, %v322, 0.0
  %489 = vadd.xlane.f32.xlu0 %v488
  %v490 = vpop.xlane.xlu0 %489
  %v491 = vsel %vm78, %v323, 0.0
  %492 = vadd.xlane.f32.xlu0 %v491
  %v493 = vpop.xlane.xlu0 %492
  %v494 = vsel %vm78, %v324, 0.0
  %495 = vadd.xlane.f32.xlu0 %v494
  %v496 = vpop.xlane.xlu0 %495
  %v497 = vsel %vm78, %v325, 0.0
  %498 = vadd.xlane.f32.xlu0 %v497
  %v499 = vpop.xlane.xlu0 %498
  %v500 = vsel %vm78, %v326, 0.0
  %501 = vadd.xlane.f32.xlu0 %v500
  %v502 = vpop.xlane.xlu0 %501
  %v503 = vsel %vm78, %v327, 0.0
  %504 = vadd.xlane.f32.xlu0 %v503
  %v505 = vpop.xlane.xlu0 %504
  %v506 = vsel %vm78, %v328, 0.0
  %507 = vadd.xlane.f32.xlu0 %v506
  %v508 = vpop.xlane.xlu0 %507
  %v509 = vsel %vm78, %v329, 0.0
  %510 = vadd.xlane.f32.xlu0 %v509
  %v511 = vpop.xlane.xlu0 %510
  %v512 = vsel %vm78, %v330, 0.0
  %513 = vadd.xlane.f32.xlu0 %v512
  %v514 = vpop.xlane.xlu0 %513
  %v515 = vsel %vm78, %v331, 0.0
  %516 = vadd.xlane.f32.xlu0 %v515
  %v517 = vpop.xlane.xlu0 %516
  %v518 = vsel %vm78, %v332, 0.0
  %519 = vadd.xlane.f32.xlu0 %v518
  %v520 = vpop.xlane.xlu0 %519
  %v521 = vsel %vm78, %v333, 0.0
  %522 = vadd.xlane.f32.xlu0 %v521
  %v523 = vpop.xlane.xlu0 %522
  %v524 = vsel %vm78, %v334, 0.0
  %525 = vadd.xlane.f32.xlu0 %v524
  %v526 = vpop.xlane.xlu0 %525
  %v527 = vmul.f32 %v81, 0.03125
  %v528 = vmul.f32 %v84, 0.03125
  %v529 = vmul.f32 %v87, 0.03125
  %v530 = vmul.f32 %v90, 0.03125
  %v531 = vmul.f32 %v93, 0.03125
  %v532 = vmul.f32 %v96, 0.03125
  %v533 = vmul.f32 %v99, 0.03125
  %v534 = vmul.f32 %v102, 0.03125
  %v535 = vmul.f32 %v105, 0.03125
  %v536 = vmul.f32 %v108, 0.03125
  %v537 = vmul.f32 %v111, 0.03125
  %v538 = vmul.f32 %v114, 0.03125
  %v539 = vmul.f32 %v117, 0.03125
  %v540 = vmul.f32 %v120, 0.03125
  %v541 = vmul.f32 %v123, 0.03125
  %v542 = vmul.f32 %v126, 0.03125
  %v543 = vmul.f32 %v129, 0.03125
  %v544 = vmul.f32 %v132, 0.03125
  %v545 = vmul.f32 %v135, 0.03125
  %v546 = vmul.f32 %v138, 0.03125
  %v547 = vmul.f32 %v141, 0.03125
  %v548 = vmul.f32 %v144, 0.03125
  %v549 = vmul.f32 %v147, 0.03125
  %v550 = vmul.f32 %v150, 0.03125
  %v551 = vmul.f32 %v153, 0.03125
  %v552 = vmul.f32 %v156, 0.03125
  %v553 = vmul.f32 %v159, 0.03125
  %v554 = vmul.f32 %v162, 0.03125
  %v555 = vmul.f32 %v165, 0.03125
  %v556 = vmul.f32 %v168, 0.03125
  %v557 = vmul.f32 %v171, 0.03125
  %v558 = vmul.f32 %v174, 0.03125
  %v559 = vmul.f32 %v177, 0.03125
  %v560 = vmul.f32 %v180, 0.03125
  %v561 = vmul.f32 %v183, 0.03125
  %v562 = vmul.f32 %v186, 0.03125
  %v563 = vmul.f32 %v189, 0.03125
  %v564 = vmul.f32 %v192, 0.03125
  %v565 = vmul.f32 %v195, 0.03125
  %v566 = vmul.f32 %v198, 0.03125
  %v567 = vmul.f32 %v201, 0.03125
  %v568 = vmul.f32 %v204, 0.03125
  %v569 = vmul.f32 %v207, 0.03125
  %v570 = vmul.f32 %v210, 0.03125
  %v571 = vmul.f32 %v213, 0.03125
  %v572 = vmul.f32 %v216, 0.03125
  %v573 = vmul.f32 %v219, 0.03125
  %v574 = vmul.f32 %v222, 0.03125
  %v575 = vmul.f32 %v225, 0.03125
  %v576 = vmul.f32 %v228, 0.03125
  %v577 = vmul.f32 %v231, 0.03125
  %v578 = vmul.f32 %v234, 0.03125
  %v579 = vmul.f32 %v237, 0.03125
  %v580 = vmul.f32 %v240, 0.03125
  %v581 = vmul.f32 %v243, 0.03125
  %v582 = vmul.f32 %v246, 0.03125
  %v583 = vmul.f32 %v249, 0.03125
  %v584 = vmul.f32 %v252, 0.03125
  %v585 = vmul.f32 %v255, 0.03125
  %v586 = vmul.f32 %v258, 0.03125
  %v587 = vmul.f32 %v261, 0.03125
  %v588 = vmul.f32 %v264, 0.03125
  %v589 = vmul.f32 %v267, 0.03125
  %v590 = vmul.f32 %v270, 0.03125
  %v591 = vmul.f32 %v337, 0.03125
  %v592 = vmul.f32 %v340, 0.03125
  %v593 = vmul.f32 %v343, 0.03125
  %v594 = vmul.f32 %v346, 0.03125
  %v595 = vmul.f32 %v349, 0.03125
  %v596 = vmul.f32 %v352, 0.03125
  %v597 = vmul.f32 %v355, 0.03125
  %v598 = vmul.f32 %v358, 0.03125
  %v599 = vmul.f32 %v361, 0.03125
  %v600 = vmul.f32 %v364, 0.03125
  %v601 = vmul.f32 %v367, 0.03125
  %v602 = vmul.f32 %v370, 0.03125
  %v603 = vmul.f32 %v373, 0.03125
  %v604 = vmul.f32 %v376, 0.03125
  %v605 = vmul.f32 %v379, 0.03125
  %v606 = vmul.f32 %v382, 0.03125
  %v607 = vmul.f32 %v385, 0.03125
  %v608 = vmul.f32 %v388, 0.03125
  %v609 = vmul.f32 %v391, 0.03125
  %v610 = vmul.f32 %v394, 0.03125
  %v611 = vmul.f32 %v397, 0.03125
  %v612 = vmul.f32 %v400, 0.03125
  %v613 = vmul.f32 %v403, 0.03125
  %v614 = vmul.f32 %v406, 0.03125
  %v615 = vmul.f32 %v409, 0.03125
  %v616 = vmul.f32 %v412, 0.03125
  %v617 = vmul.f32 %v415, 0.03125
  %v618 = vmul.f32 %v418, 0.03125
  %v619 = vmul.f32 %v421, 0.03125
  %v620 = vmul.f32 %v424, 0.03125
  %v621 = vmul.f32 %v427, 0.03125
  %v622 = vmul.f32 %v430, 0.03125
  %v623 = vmul.f32 %v433, 0.03125
  %v624 = vmul.f32 %v436, 0.03125
  %v625 = vmul.f32 %v439, 0.03125
  %v626 = vmul.f32 %v442, 0.03125
  %v627 = vmul.f32 %v445, 0.03125
  %v628 = vmul.f32 %v448, 0.03125
  %v629 = vmul.f32 %v451, 0.03125
  %v630 = vmul.f32 %v454, 0.03125
  %v631 = vmul.f32 %v457, 0.03125
  %v632 = vmul.f32 %v460, 0.03125
  %v633 = vmul.f32 %v463, 0.03125
  %v634 = vmul.f32 %v466, 0.03125
  %v635 = vmul.f32 %v469, 0.03125
  %v636 = vmul.f32 %v472, 0.03125
  %v637 = vmul.f32 %v475, 0.03125
  %v638 = vmul.f32 %v478, 0.03125
  %v639 = vmul.f32 %v481, 0.03125
  %v640 = vmul.f32 %v484, 0.03125
  %v641 = vmul.f32 %v487, 0.03125
  %v642 = vmul.f32 %v490, 0.03125
  %v643 = vmul.f32 %v493, 0.03125
  %v644 = vmul.f32 %v496, 0.03125
  %v645 = vmul.f32 %v499, 0.03125
  %v646 = vmul.f32 %v502, 0.03125
  %v647 = vmul.f32 %v505, 0.03125
  %v648 = vmul.f32 %v508, 0.03125
  %v649 = vmul.f32 %v511, 0.03125
  %v650 = vmul.f32 %v514, 0.03125
  %v651 = vmul.f32 %v517, 0.03125
  %v652 = vmul.f32 %v520, 0.03125
  %v653 = vmul.f32 %v523, 0.03125
  %v654 = vmul.f32 %v526, 0.03125
  %v655 = vmul.f32 %v527, %v527
  %v656 = vmul.f32 %v528, %v528
  %v657 = vmul.f32 %v529, %v529
  %v658 = vmul.f32 %v530, %v530
  %v659 = vmul.f32 %v531, %v531
  %v660 = vmul.f32 %v532, %v532
  %v661 = vmul.f32 %v533, %v533
  %v662 = vmul.f32 %v534, %v534
  %v663 = vmul.f32 %v535, %v535
  %v664 = vmul.f32 %v536, %v536
  %v665 = vmul.f32 %v537, %v537
  %v666 = vmul.f32 %v538, %v538
  %v667 = vmul.f32 %v539, %v539
  %v668 = vmul.f32 %v540, %v540
  %v669 = vmul.f32 %v541, %v541
  %v670 = vmul.f32 %v542, %v542
  %v671 = vmul.f32 %v543, %v543
  %v672 = vmul.f32 %v544, %v544
  %v673 = vmul.f32 %v545, %v545
  %v674 = vmul.f32 %v546, %v546
  %v675 = vmul.f32 %v547, %v547
  %v676 = vmul.f32 %v548, %v548
  %v677 = vmul.f32 %v549, %v549
  %v678 = vmul.f32 %v550, %v550
  %v679 = vmul.f32 %v551, %v551
  %v680 = vmul.f32 %v552, %v552
  %v681 = vmul.f32 %v553, %v553
  %v682 = vmul.f32 %v554, %v554
  %v683 = vmul.f32 %v555, %v555
  %v684 = vmul.f32 %v556, %v556
  %v685 = vmul.f32 %v557, %v557
  %v686 = vmul.f32 %v558, %v558
  %v687 = vmul.f32 %v559, %v559
  %v688 = vmul.f32 %v560, %v560
  %v689 = vmul.f32 %v561, %v561
  %v690 = vmul.f32 %v562, %v562
  %v691 = vmul.f32 %v563, %v563
  %v692 = vmul.f32 %v564, %v564
  %v693 = vmul.f32 %v565, %v565
  %v694 = vmul.f32 %v566, %v566
  %v695 = vmul.f32 %v567, %v567
  %v696 = vmul.f32 %v568, %v568
  %v697 = vmul.f32 %v569, %v569
  %v698 = vmul.f32 %v570, %v570
  %v699 = vmul.f32 %v571, %v571
  %v700 = vmul.f32 %v572, %v572
  %v701 = vmul.f32 %v573, %v573
  %v702 = vmul.f32 %v574, %v574
  %v703 = vmul.f32 %v575, %v575
  %v704 = vmul.f32 %v576, %v576
  %v705 = vmul.f32 %v577, %v577
  %v706 = vmul.f32 %v578, %v578
  %v707 = vmul.f32 %v579, %v579
  %v708 = vmul.f32 %v580, %v580
  %v709 = vmul.f32 %v581, %v581
  %v710 = vmul.f32 %v582, %v582
  %v711 = vmul.f32 %v583, %v583
  %v712 = vmul.f32 %v584, %v584
  %v713 = vmul.f32 %v585, %v585
  %v714 = vmul.f32 %v586, %v586
  %v715 = vmul.f32 %v587, %v587
  %v716 = vmul.f32 %v588, %v588
  %v717 = vmul.f32 %v589, %v589
  %v718 = vmul.f32 %v590, %v590
  %v719 = vsub.f32 %v591, %v655
  %v720 = vsub.f32 %v592, %v656
  %v721 = vsub.f32 %v593, %v657
  %v722 = vsub.f32 %v594, %v658
  %v723 = vsub.f32 %v595, %v659
  %v724 = vsub.f32 %v596, %v660
  %v725 = vsub.f32 %v597, %v661
  %v726 = vsub.f32 %v598, %v662
  %v727 = vsub.f32 %v599, %v663
  %v728 = vsub.f32 %v600, %v664
  %v729 = vsub.f32 %v601, %v665
  %v730 = vsub.f32 %v602, %v666
  %v731 = vsub.f32 %v603, %v667
  %v732 = vsub.f32 %v604, %v668
  %v733 = vsub.f32 %v605, %v669
  %v734 = vsub.f32 %v606, %v670
  %v735 = vsub.f32 %v607, %v671
  %v736 = vsub.f32 %v608, %v672
  %v737 = vsub.f32 %v609, %v673
  %v738 = vsub.f32 %v610, %v674
  %v739 = vsub.f32 %v611, %v675
  %v740 = vsub.f32 %v612, %v676
  %v741 = vsub.f32 %v613, %v677
  %v742 = vsub.f32 %v614, %v678
  %v743 = vsub.f32 %v615, %v679
  %v744 = vsub.f32 %v616, %v680
  %v745 = vsub.f32 %v617, %v681
  %v746 = vsub.f32 %v618, %v682
  %v747 = vsub.f32 %v619, %v683
  %v748 = vsub.f32 %v620, %v684
  %v749 = vsub.f32 %v621, %v685
  %v750 = vsub.f32 %v622, %v686
  %v751 = vsub.f32 %v623, %v687
  %v752 = vsub.f32 %v624, %v688
  %v753 = vsub.f32 %v625, %v689
  %v754 = vsub.f32 %v626, %v690
  %v755 = vsub.f32 %v627, %v691
  %v756 = vsub.f32 %v628, %v692
  %v757 = vsub.f32 %v629, %v693
  %v758 = vsub.f32 %v630, %v694
  %v759 = vsub.f32 %v631, %v695
  %v760 = vsub.f32 %v632, %v696
  %v761 = vsub.f32 %v633, %v697
  %v762 = vsub.f32 %v634, %v698
  %v763 = vsub.f32 %v635, %v699
  %v764 = vsub.f32 %v636, %v700
  %v765 = vsub.f32 %v637, %v701
  %v766 = vsub.f32 %v638, %v702
  %v767 = vsub.f32 %v639, %v703
  %v768 = vsub.f32 %v640, %v704
  %v769 = vsub.f32 %v641, %v705
  %v770 = vsub.f32 %v642, %v706
  %v771 = vsub.f32 %v643, %v707
  %v772 = vsub.f32 %v644, %v708
  %v773 = vsub.f32 %v645, %v709
  %v774 = vsub.f32 %v646, %v710
  %v775 = vsub.f32 %v647, %v711
  %v776 = vsub.f32 %v648, %v712
  %v777 = vsub.f32 %v649, %v713
  %v778 = vsub.f32 %v650, %v714
  %v779 = vsub.f32 %v651, %v715
  %v780 = vsub.f32 %v652, %v716
  %v781 = vsub.f32 %v653, %v717
  %v782 = vsub.f32 %v654, %v718
  %v783 = vmax.f32 %v719, 0.0
  %v784 = vmax.f32 %v720, 0.0
  %v785 = vmax.f32 %v721, 0.0
  %v786 = vmax.f32 %v722, 0.0
  %v787 = vmax.f32 %v723, 0.0
  %v788 = vmax.f32 %v724, 0.0
  %v789 = vmax.f32 %v725, 0.0
  %v790 = vmax.f32 %v726, 0.0
  %v791 = vmax.f32 %v727, 0.0
  %v792 = vmax.f32 %v728, 0.0
  %v793 = vmax.f32 %v729, 0.0
  %v794 = vmax.f32 %v730, 0.0
  %v795 = vmax.f32 %v731, 0.0
  %v796 = vmax.f32 %v732, 0.0
  %v797 = vmax.f32 %v733, 0.0
  %v798 = vmax.f32 %v734, 0.0
  %v799 = vmax.f32 %v735, 0.0
  %v800 = vmax.f32 %v736, 0.0
  %v801 = vmax.f32 %v737, 0.0
  %v802 = vmax.f32 %v738, 0.0
  %v803 = vmax.f32 %v739, 0.0
  %v804 = vmax.f32 %v740, 0.0
  %v805 = vmax.f32 %v741, 0.0
  %v806 = vmax.f32 %v742, 0.0
  %v807 = vmax.f32 %v743, 0.0
  %v808 = vmax.f32 %v744, 0.0
  %v809 = vmax.f32 %v745, 0.0
  %v810 = vmax.f32 %v746, 0.0
  %v811 = vmax.f32 %v747, 0.0
  %v812 = vmax.f32 %v748, 0.0
  %v813 = vmax.f32 %v749, 0.0
  %v814 = vmax.f32 %v750, 0.0
  %v815 = vmax.f32 %v751, 0.0
  %v816 = vmax.f32 %v752, 0.0
  %v817 = vmax.f32 %v753, 0.0
  %v818 = vmax.f32 %v754, 0.0
  %v819 = vmax.f32 %v755, 0.0
  %v820 = vmax.f32 %v756, 0.0
  %v821 = vmax.f32 %v757, 0.0
  %v822 = vmax.f32 %v758, 0.0
  %v823 = vmax.f32 %v759, 0.0
  %v824 = vmax.f32 %v760, 0.0
  %v825 = vmax.f32 %v761, 0.0
  %v826 = vmax.f32 %v762, 0.0
  %v827 = vmax.f32 %v763, 0.0
  %v828 = vmax.f32 %v764, 0.0
  %v829 = vmax.f32 %v765, 0.0
  %v830 = vmax.f32 %v766, 0.0
  %v831 = vmax.f32 %v767, 0.0
  %v832 = vmax.f32 %v768, 0.0
  %v833 = vmax.f32 %v769, 0.0
  %v834 = vmax.f32 %v770, 0.0
  %v835 = vmax.f32 %v771, 0.0
  %v836 = vmax.f32 %v772, 0.0
  %v837 = vmax.f32 %v773, 0.0
  %v838 = vmax.f32 %v774, 0.0
  %v839 = vmax.f32 %v775, 0.0
  %v840 = vmax.f32 %v776, 0.0
  %v841 = vmax.f32 %v777, 0.0
  %v842 = vmax.f32 %v778, 0.0
  %v843 = vmax.f32 %v779, 0.0
  %v844 = vmax.f32 %v780, 0.0
  %v845 = vmax.f32 %v781, 0.0
  %v846 = vmax.f32 %v782, 0.0
  %v847 = vsub.f32 %v14, %v527
  %v848 = vsub.f32 %v15, %v528
  %v849 = vsub.f32 %v16, %v529
  %v850 = vsub.f32 %v17, %v530
  %v851 = vsub.f32 %v18, %v531
  %v852 = vsub.f32 %v19, %v532
  %v853 = vsub.f32 %v20, %v533
  %v854 = vsub.f32 %v21, %v534
  %v855 = vsub.f32 %v22, %v535
  %v856 = vsub.f32 %v23, %v536
  %v857 = vsub.f32 %v24, %v537
  %v858 = vsub.f32 %v25, %v538
  %v859 = vsub.f32 %v26, %v539
  %v860 = vsub.f32 %v27, %v540
  %v861 = vsub.f32 %v28, %v541
  %v862 = vsub.f32 %v29, %v542
  %v863 = vsub.f32 %v30, %v543
  %v864 = vsub.f32 %v31, %v544
  %v865 = vsub.f32 %v32, %v545
  %v866 = vsub.f32 %v33, %v546
  %v867 = vsub.f32 %v34, %v547
  %v868 = vsub.f32 %v35, %v548
  %v869 = vsub.f32 %v36, %v549
  %v870 = vsub.f32 %v37, %v550
  %v871 = vsub.f32 %v38, %v551
  %v872 = vsub.f32 %v39, %v552
  %v873 = vsub.f32 %v40, %v553
  %v874 = vsub.f32 %v41, %v554
  %v875 = vsub.f32 %v42, %v555
  %v876 = vsub.f32 %v43, %v556
  %v877 = vsub.f32 %v44, %v557
  %v878 = vsub.f32 %v45, %v558
  %v879 = vsub.f32 %v46, %v559
  %v880 = vsub.f32 %v47, %v560
  %v881 = vsub.f32 %v48, %v561
  %v882 = vsub.f32 %v49, %v562
  %v883 = vsub.f32 %v50, %v563
  %v884 = vsub.f32 %v51, %v564
  %v885 = vsub.f32 %v52, %v565
  %v886 = vsub.f32 %v53, %v566
  %v887 = vsub.f32 %v54, %v567
  %v888 = vsub.f32 %v55, %v568
  %v889 = vsub.f32 %v56, %v569
  %v890 = vsub.f32 %v57, %v570
  %v891 = vsub.f32 %v58, %v571
  %v892 = vsub.f32 %v59, %v572
  %v893 = vsub.f32 %v60, %v573
  %v894 = vsub.f32 %v61, %v574
  %v895 = vsub.f32 %v62, %v575
  %v896 = vsub.f32 %v63, %v576
  %v897 = vsub.f32 %v64, %v577
  %v898 = vsub.f32 %v65, %v578
  %v899 = vsub.f32 %v66, %v579
  %v900 = vsub.f32 %v67, %v580
  %v901 = vsub.f32 %v68, %v581
  %v902 = vsub.f32 %v69, %v582
  %v903 = vsub.f32 %v70, %v583
  %v904 = vsub.f32 %v71, %v584
  %v905 = vsub.f32 %v72, %v585
  %v906 = vsub.f32 %v73, %v586
  %v907 = vsub.f32 %v74, %v587
  %v908 = vsub.f32 %v75, %v588
  %v909 = vsub.f32 %v76, %v589
  %v910 = vsub.f32 %v77, %v590
  %v911 = vadd.f32 %v783, 1e-06
  %v912 = vadd.f32 %v784, 1e-06
  %v913 = vadd.f32 %v785, 1e-06
  %v914 = vadd.f32 %v786, 1e-06
  %v915 = vadd.f32 %v787, 1e-06
  %v916 = vadd.f32 %v788, 1e-06
  %v917 = vadd.f32 %v789, 1e-06
  %v918 = vadd.f32 %v790, 1e-06
  %v919 = vadd.f32 %v791, 1e-06
  %v920 = vadd.f32 %v792, 1e-06
  %v921 = vadd.f32 %v793, 1e-06
  %v922 = vadd.f32 %v794, 1e-06
  %v923 = vadd.f32 %v795, 1e-06
  %v924 = vadd.f32 %v796, 1e-06
  %v925 = vadd.f32 %v797, 1e-06
  %v926 = vadd.f32 %v798, 1e-06
  %v927 = vadd.f32 %v799, 1e-06
  %v928 = vadd.f32 %v800, 1e-06
  %v929 = vadd.f32 %v801, 1e-06
  %v930 = vadd.f32 %v802, 1e-06
  %v931 = vadd.f32 %v803, 1e-06
  %v932 = vadd.f32 %v804, 1e-06
  %v933 = vadd.f32 %v805, 1e-06
  %v934 = vadd.f32 %v806, 1e-06
  %v935 = vadd.f32 %v807, 1e-06
  %v936 = vadd.f32 %v808, 1e-06
  %v937 = vadd.f32 %v809, 1e-06
  %v938 = vadd.f32 %v810, 1e-06
  %v939 = vadd.f32 %v811, 1e-06
  %v940 = vadd.f32 %v812, 1e-06
  %v941 = vadd.f32 %v813, 1e-06
  %v942 = vadd.f32 %v814, 1e-06
  %v943 = vadd.f32 %v815, 1e-06
  %v944 = vadd.f32 %v816, 1e-06
  %v945 = vadd.f32 %v817, 1e-06
  %v946 = vadd.f32 %v818, 1e-06
  %v947 = vadd.f32 %v819, 1e-06
  %v948 = vadd.f32 %v820, 1e-06
  %v949 = vadd.f32 %v821, 1e-06
  %v950 = vadd.f32 %v822, 1e-06
  %v951 = vadd.f32 %v823, 1e-06
  %v952 = vadd.f32 %v824, 1e-06
  %v953 = vadd.f32 %v825, 1e-06
  %v954 = vadd.f32 %v826, 1e-06
  %v955 = vadd.f32 %v827, 1e-06
  %v956 = vadd.f32 %v828, 1e-06
  %v957 = vadd.f32 %v829, 1e-06
  %v958 = vadd.f32 %v830, 1e-06
  %v959 = vadd.f32 %v831, 1e-06
  %v960 = vadd.f32 %v832, 1e-06
  %v961 = vadd.f32 %v833, 1e-06
  %v962 = vadd.f32 %v834, 1e-06
  %v963 = vadd.f32 %v835, 1e-06
  %v964 = vadd.f32 %v836, 1e-06
  %v965 = vadd.f32 %v837, 1e-06
  %v966 = vadd.f32 %v838, 1e-06
  %v967 = vadd.f32 %v839, 1e-06
  %v968 = vadd.f32 %v840, 1e-06
  %v969 = vadd.f32 %v841, 1e-06
  %v970 = vadd.f32 %v842, 1e-06
  %v971 = vadd.f32 %v843, 1e-06
  %v972 = vadd.f32 %v844, 1e-06
  %v973 = vadd.f32 %v845, 1e-06
  %v974 = vadd.f32 %v846, 1e-06
  %v975 = vrsqrt.pop %v911
  %v976 = vmul.f32 %v975, %v911
  %v977 = vmul.f32 %v976, %v975
  %v978 = vmul.f32 0.5, %v977
  %v979 = vsub.f32 1.5, %v978
  %v980 = vmul.f32 %v975, %v979
  %vm981 = vweird.f32 %v911
  %vm982 = vweird.f32 %v975
  %vm983 = vmor %vm981, %vm982
  %v984 = vsel %vm983, %v975, %v980
  %v985 = vrsqrt.pop %v912
  %v986 = vmul.f32 %v985, %v912
  %v987 = vmul.f32 %v986, %v985
  %v988 = vmul.f32 0.5, %v987
  %v989 = vsub.f32 1.5, %v988
  %v990 = vmul.f32 %v985, %v989
  %vm991 = vweird.f32 %v912
  %vm992 = vweird.f32 %v985
  %vm993 = vmor %vm991, %vm992
  %v994 = vsel %vm993, %v985, %v990
  %v995 = vrsqrt.pop %v913
  %v996 = vmul.f32 %v995, %v913
  %v997 = vmul.f32 %v996, %v995
  %v998 = vmul.f32 0.5, %v997
  %v999 = vsub.f32 1.5, %v998
  %v1000 = vmul.f32 %v995, %v999
  %vm1001 = vweird.f32 %v913
  %vm1002 = vweird.f32 %v995
  %vm1003 = vmor %vm1001, %vm1002
  %v1004 = vsel %vm1003, %v995, %v1000
  %v1005 = vrsqrt.pop %v914
  %v1006 = vmul.f32 %v1005, %v914
  %v1007 = vmul.f32 %v1006, %v1005
  %v1008 = vmul.f32 0.5, %v1007
  %v1009 = vsub.f32 1.5, %v1008
  %v1010 = vmul.f32 %v1005, %v1009
  %vm1011 = vweird.f32 %v914
  %vm1012 = vweird.f32 %v1005
  %vm1013 = vmor %vm1011, %vm1012
  %v1014 = vsel %vm1013, %v1005, %v1010
  %v1015 = vrsqrt.pop %v915
  %v1016 = vmul.f32 %v1015, %v915
  %v1017 = vmul.f32 %v1016, %v1015
  %v1018 = vmul.f32 0.5, %v1017
  %v1019 = vsub.f32 1.5, %v1018
  %v1020 = vmul.f32 %v1015, %v1019
  %vm1021 = vweird.f32 %v915
  %vm1022 = vweird.f32 %v1015
  %vm1023 = vmor %vm1021, %vm1022
  %v1024 = vsel %vm1023, %v1015, %v1020
  %v1025 = vrsqrt.pop %v916
  %v1026 = vmul.f32 %v1025, %v916
  %v1027 = vmul.f32 %v1026, %v1025
  %v1028 = vmul.f32 0.5, %v1027
  %v1029 = vsub.f32 1.5, %v1028
  %v1030 = vmul.f32 %v1025, %v1029
  %vm1031 = vweird.f32 %v916
  %vm1032 = vweird.f32 %v1025
  %vm1033 = vmor %vm1031, %vm1032
  %v1034 = vsel %vm1033, %v1025, %v1030
  %v1035 = vrsqrt.pop %v917
  %v1036 = vmul.f32 %v1035, %v917
  %v1037 = vmul.f32 %v1036, %v1035
  %v1038 = vmul.f32 0.5, %v1037
  %v1039 = vsub.f32 1.5, %v1038
  %v1040 = vmul.f32 %v1035, %v1039
  %vm1041 = vweird.f32 %v917
  %vm1042 = vweird.f32 %v1035
  %vm1043 = vmor %vm1041, %vm1042
  %v1044 = vsel %vm1043, %v1035, %v1040
  %v1045 = vrsqrt.pop %v918
  %v1046 = vmul.f32 %v1045, %v918
  %v1047 = vmul.f32 %v1046, %v1045
  %v1048 = vmul.f32 0.5, %v1047
  %v1049 = vsub.f32 1.5, %v1048
  %v1050 = vmul.f32 %v1045, %v1049
  %vm1051 = vweird.f32 %v918
  %vm1052 = vweird.f32 %v1045
  %vm1053 = vmor %vm1051, %vm1052
  %v1054 = vsel %vm1053, %v1045, %v1050
  %v1055 = vrsqrt.pop %v919
  %v1056 = vmul.f32 %v1055, %v919
  %v1057 = vmul.f32 %v1056, %v1055
  %v1058 = vmul.f32 0.5, %v1057
  %v1059 = vsub.f32 1.5, %v1058
  %v1060 = vmul.f32 %v1055, %v1059
  %vm1061 = vweird.f32 %v919
  %vm1062 = vweird.f32 %v1055
  %vm1063 = vmor %vm1061, %vm1062
  %v1064 = vsel %vm1063, %v1055, %v1060
  %v1065 = vrsqrt.pop %v920
  %v1066 = vmul.f32 %v1065, %v920
  %v1067 = vmul.f32 %v1066, %v1065
  %v1068 = vmul.f32 0.5, %v1067
  %v1069 = vsub.f32 1.5, %v1068
  %v1070 = vmul.f32 %v1065, %v1069
  %vm1071 = vweird.f32 %v920
  %vm1072 = vweird.f32 %v1065
  %vm1073 = vmor %vm1071, %vm1072
  %v1074 = vsel %vm1073, %v1065, %v1070
  %v1075 = vrsqrt.pop %v921
  %v1076 = vmul.f32 %v1075, %v921
  %v1077 = vmul.f32 %v1076, %v1075
  %v1078 = vmul.f32 0.5, %v1077
  %v1079 = vsub.f32 1.5, %v1078
  %v1080 = vmul.f32 %v1075, %v1079
  %vm1081 = vweird.f32 %v921
  %vm1082 = vweird.f32 %v1075
  %vm1083 = vmor %vm1081, %vm1082
  %v1084 = vsel %vm1083, %v1075, %v1080
  %v1085 = vrsqrt.pop %v922
  %v1086 = vmul.f32 %v1085, %v922
  %v1087 = vmul.f32 %v1086, %v1085
  %v1088 = vmul.f32 0.5, %v1087
  %v1089 = vsub.f32 1.5, %v1088
  %v1090 = vmul.f32 %v1085, %v1089
  %vm1091 = vweird.f32 %v922
  %vm1092 = vweird.f32 %v1085
  %vm1093 = vmor %vm1091, %vm1092
  %v1094 = vsel %vm1093, %v1085, %v1090
  %v1095 = vrsqrt.pop %v923
  %v1096 = vmul.f32 %v1095, %v923
  %v1097 = vmul.f32 %v1096, %v1095
  %v1098 = vmul.f32 0.5, %v1097
  %v1099 = vsub.f32 1.5, %v1098
  %v1100 = vmul.f32 %v1095, %v1099
  %vm1101 = vweird.f32 %v923
  %vm1102 = vweird.f32 %v1095
  %vm1103 = vmor %vm1101, %vm1102
  %v1104 = vsel %vm1103, %v1095, %v1100
  %v1105 = vrsqrt.pop %v924
  %v1106 = vmul.f32 %v1105, %v924
  %v1107 = vmul.f32 %v1106, %v1105
  %v1108 = vmul.f32 0.5, %v1107
  %v1109 = vsub.f32 1.5, %v1108
  %v1110 = vmul.f32 %v1105, %v1109
  %vm1111 = vweird.f32 %v924
  %vm1112 = vweird.f32 %v1105
  %vm1113 = vmor %vm1111, %vm1112
  %v1114 = vsel %vm1113, %v1105, %v1110
  %v1115 = vrsqrt.pop %v925
  %v1116 = vmul.f32 %v1115, %v925
  %v1117 = vmul.f32 %v1116, %v1115
  %v1118 = vmul.f32 0.5, %v1117
  %v1119 = vsub.f32 1.5, %v1118
  %v1120 = vmul.f32 %v1115, %v1119
  %vm1121 = vweird.f32 %v925
  %vm1122 = vweird.f32 %v1115
  %vm1123 = vmor %vm1121, %vm1122
  %v1124 = vsel %vm1123, %v1115, %v1120
  %v1125 = vrsqrt.pop %v926
  %v1126 = vmul.f32 %v1125, %v926
  %v1127 = vmul.f32 %v1126, %v1125
  %v1128 = vmul.f32 0.5, %v1127
  %v1129 = vsub.f32 1.5, %v1128
  %v1130 = vmul.f32 %v1125, %v1129
  %vm1131 = vweird.f32 %v926
  %vm1132 = vweird.f32 %v1125
  %vm1133 = vmor %vm1131, %vm1132
  %v1134 = vsel %vm1133, %v1125, %v1130
  %v1135 = vrsqrt.pop %v927
  %v1136 = vmul.f32 %v1135, %v927
  %v1137 = vmul.f32 %v1136, %v1135
  %v1138 = vmul.f32 0.5, %v1137
  %v1139 = vsub.f32 1.5, %v1138
  %v1140 = vmul.f32 %v1135, %v1139
  %vm1141 = vweird.f32 %v927
  %vm1142 = vweird.f32 %v1135
  %vm1143 = vmor %vm1141, %vm1142
  %v1144 = vsel %vm1143, %v1135, %v1140
  %v1145 = vrsqrt.pop %v928
  %v1146 = vmul.f32 %v1145, %v928
  %v1147 = vmul.f32 %v1146, %v1145
  %v1148 = vmul.f32 0.5, %v1147
  %v1149 = vsub.f32 1.5, %v1148
  %v1150 = vmul.f32 %v1145, %v1149
  %vm1151 = vweird.f32 %v928
  %vm1152 = vweird.f32 %v1145
  %vm1153 = vmor %vm1151, %vm1152
  %v1154 = vsel %vm1153, %v1145, %v1150
  %v1155 = vrsqrt.pop %v929
  %v1156 = vmul.f32 %v1155, %v929
  %v1157 = vmul.f32 %v1156, %v1155
  %v1158 = vmul.f32 0.5, %v1157
  %v1159 = vsub.f32 1.5, %v1158
  %v1160 = vmul.f32 %v1155, %v1159
  %vm1161 = vweird.f32 %v929
  %vm1162 = vweird.f32 %v1155
  %vm1163 = vmor %vm1161, %vm1162
  %v1164 = vsel %vm1163, %v1155, %v1160
  %v1165 = vrsqrt.pop %v930
  %v1166 = vmul.f32 %v1165, %v930
  %v1167 = vmul.f32 %v1166, %v1165
  %v1168 = vmul.f32 0.5, %v1167
  %v1169 = vsub.f32 1.5, %v1168
  %v1170 = vmul.f32 %v1165, %v1169
  %vm1171 = vweird.f32 %v930
  %vm1172 = vweird.f32 %v1165
  %vm1173 = vmor %vm1171, %vm1172
  %v1174 = vsel %vm1173, %v1165, %v1170
  %v1175 = vrsqrt.pop %v931
  %v1176 = vmul.f32 %v1175, %v931
  %v1177 = vmul.f32 %v1176, %v1175
  %v1178 = vmul.f32 0.5, %v1177
  %v1179 = vsub.f32 1.5, %v1178
  %v1180 = vmul.f32 %v1175, %v1179
  %vm1181 = vweird.f32 %v931
  %vm1182 = vweird.f32 %v1175
  %vm1183 = vmor %vm1181, %vm1182
  %v1184 = vsel %vm1183, %v1175, %v1180
  %v1185 = vrsqrt.pop %v932
  %v1186 = vmul.f32 %v1185, %v932
  %v1187 = vmul.f32 %v1186, %v1185
  %v1188 = vmul.f32 0.5, %v1187
  %v1189 = vsub.f32 1.5, %v1188
  %v1190 = vmul.f32 %v1185, %v1189
  %vm1191 = vweird.f32 %v932
  %vm1192 = vweird.f32 %v1185
  %vm1193 = vmor %vm1191, %vm1192
  %v1194 = vsel %vm1193, %v1185, %v1190
  %v1195 = vrsqrt.pop %v933
  %v1196 = vmul.f32 %v1195, %v933
  %v1197 = vmul.f32 %v1196, %v1195
  %v1198 = vmul.f32 0.5, %v1197
  %v1199 = vsub.f32 1.5, %v1198
  %v1200 = vmul.f32 %v1195, %v1199
  %vm1201 = vweird.f32 %v933
  %vm1202 = vweird.f32 %v1195
  %vm1203 = vmor %vm1201, %vm1202
  %v1204 = vsel %vm1203, %v1195, %v1200
  %v1205 = vrsqrt.pop %v934
  %v1206 = vmul.f32 %v1205, %v934
  %v1207 = vmul.f32 %v1206, %v1205
  %v1208 = vmul.f32 0.5, %v1207
  %v1209 = vsub.f32 1.5, %v1208
  %v1210 = vmul.f32 %v1205, %v1209
  %vm1211 = vweird.f32 %v934
  %vm1212 = vweird.f32 %v1205
  %vm1213 = vmor %vm1211, %vm1212
  %v1214 = vsel %vm1213, %v1205, %v1210
  %v1215 = vrsqrt.pop %v935
  %v1216 = vmul.f32 %v1215, %v935
  %v1217 = vmul.f32 %v1216, %v1215
  %v1218 = vmul.f32 0.5, %v1217
  %v1219 = vsub.f32 1.5, %v1218
  %v1220 = vmul.f32 %v1215, %v1219
  %vm1221 = vweird.f32 %v935
  %vm1222 = vweird.f32 %v1215
  %vm1223 = vmor %vm1221, %vm1222
  %v1224 = vsel %vm1223, %v1215, %v1220
  %v1225 = vrsqrt.pop %v936
  %v1226 = vmul.f32 %v1225, %v936
  %v1227 = vmul.f32 %v1226, %v1225
  %v1228 = vmul.f32 0.5, %v1227
  %v1229 = vsub.f32 1.5, %v1228
  %v1230 = vmul.f32 %v1225, %v1229
  %vm1231 = vweird.f32 %v936
  %vm1232 = vweird.f32 %v1225
  %vm1233 = vmor %vm1231, %vm1232
  %v1234 = vsel %vm1233, %v1225, %v1230
  %v1235 = vrsqrt.pop %v937
  %v1236 = vmul.f32 %v1235, %v937
  %v1237 = vmul.f32 %v1236, %v1235
  %v1238 = vmul.f32 0.5, %v1237
  %v1239 = vsub.f32 1.5, %v1238
  %v1240 = vmul.f32 %v1235, %v1239
  %vm1241 = vweird.f32 %v937
  %vm1242 = vweird.f32 %v1235
  %vm1243 = vmor %vm1241, %vm1242
  %v1244 = vsel %vm1243, %v1235, %v1240
  %v1245 = vrsqrt.pop %v938
  %v1246 = vmul.f32 %v1245, %v938
  %v1247 = vmul.f32 %v1246, %v1245
  %v1248 = vmul.f32 0.5, %v1247
  %v1249 = vsub.f32 1.5, %v1248
  %v1250 = vmul.f32 %v1245, %v1249
  %vm1251 = vweird.f32 %v938
  %vm1252 = vweird.f32 %v1245
  %vm1253 = vmor %vm1251, %vm1252
  %v1254 = vsel %vm1253, %v1245, %v1250
  %v1255 = vrsqrt.pop %v939
  %v1256 = vmul.f32 %v1255, %v939
  %v1257 = vmul.f32 %v1256, %v1255
  %v1258 = vmul.f32 0.5, %v1257
  %v1259 = vsub.f32 1.5, %v1258
  %v1260 = vmul.f32 %v1255, %v1259
  %vm1261 = vweird.f32 %v939
  %vm1262 = vweird.f32 %v1255
  %vm1263 = vmor %vm1261, %vm1262
  %v1264 = vsel %vm1263, %v1255, %v1260
  %v1265 = vrsqrt.pop %v940
  %v1266 = vmul.f32 %v1265, %v940
  %v1267 = vmul.f32 %v1266, %v1265
  %v1268 = vmul.f32 0.5, %v1267
  %v1269 = vsub.f32 1.5, %v1268
  %v1270 = vmul.f32 %v1265, %v1269
  %vm1271 = vweird.f32 %v940
  %vm1272 = vweird.f32 %v1265
  %vm1273 = vmor %vm1271, %vm1272
  %v1274 = vsel %vm1273, %v1265, %v1270
  %v1275 = vrsqrt.pop %v941
  %v1276 = vmul.f32 %v1275, %v941
  %v1277 = vmul.f32 %v1276, %v1275
  %v1278 = vmul.f32 0.5, %v1277
  %v1279 = vsub.f32 1.5, %v1278
  %v1280 = vmul.f32 %v1275, %v1279
  %vm1281 = vweird.f32 %v941
  %vm1282 = vweird.f32 %v1275
  %vm1283 = vmor %vm1281, %vm1282
  %v1284 = vsel %vm1283, %v1275, %v1280
  %v1285 = vrsqrt.pop %v942
  %v1286 = vmul.f32 %v1285, %v942
  %v1287 = vmul.f32 %v1286, %v1285
  %v1288 = vmul.f32 0.5, %v1287
  %v1289 = vsub.f32 1.5, %v1288
  %v1290 = vmul.f32 %v1285, %v1289
  %vm1291 = vweird.f32 %v942
  %vm1292 = vweird.f32 %v1285
  %vm1293 = vmor %vm1291, %vm1292
  %v1294 = vsel %vm1293, %v1285, %v1290
  %v1295 = vrsqrt.pop %v943
  %v1296 = vmul.f32 %v1295, %v943
  %v1297 = vmul.f32 %v1296, %v1295
  %v1298 = vmul.f32 0.5, %v1297
  %v1299 = vsub.f32 1.5, %v1298
  %v1300 = vmul.f32 %v1295, %v1299
  %vm1301 = vweird.f32 %v943
  %vm1302 = vweird.f32 %v1295
  %vm1303 = vmor %vm1301, %vm1302
  %v1304 = vsel %vm1303, %v1295, %v1300
  %v1305 = vrsqrt.pop %v944
  %v1306 = vmul.f32 %v1305, %v944
  %v1307 = vmul.f32 %v1306, %v1305
  %v1308 = vmul.f32 0.5, %v1307
  %v1309 = vsub.f32 1.5, %v1308
  %v1310 = vmul.f32 %v1305, %v1309
  %vm1311 = vweird.f32 %v944
  %vm1312 = vweird.f32 %v1305
  %vm1313 = vmor %vm1311, %vm1312
  %v1314 = vsel %vm1313, %v1305, %v1310
  %v1315 = vrsqrt.pop %v945
  %v1316 = vmul.f32 %v1315, %v945
  %v1317 = vmul.f32 %v1316, %v1315
  %v1318 = vmul.f32 0.5, %v1317
  %v1319 = vsub.f32 1.5, %v1318
  %v1320 = vmul.f32 %v1315, %v1319
  %vm1321 = vweird.f32 %v945
  %vm1322 = vweird.f32 %v1315
  %vm1323 = vmor %vm1321, %vm1322
  %v1324 = vsel %vm1323, %v1315, %v1320
  %v1325 = vrsqrt.pop %v946
  %v1326 = vmul.f32 %v1325, %v946
  %v1327 = vmul.f32 %v1326, %v1325
  %v1328 = vmul.f32 0.5, %v1327
  %v1329 = vsub.f32 1.5, %v1328
  %v1330 = vmul.f32 %v1325, %v1329
  %vm1331 = vweird.f32 %v946
  %vm1332 = vweird.f32 %v1325
  %vm1333 = vmor %vm1331, %vm1332
  %v1334 = vsel %vm1333, %v1325, %v1330
  %v1335 = vrsqrt.pop %v947
  %v1336 = vmul.f32 %v1335, %v947
  %v1337 = vmul.f32 %v1336, %v1335
  %v1338 = vmul.f32 0.5, %v1337
  %v1339 = vsub.f32 1.5, %v1338
  %v1340 = vmul.f32 %v1335, %v1339
  %vm1341 = vweird.f32 %v947
  %vm1342 = vweird.f32 %v1335
  %vm1343 = vmor %vm1341, %vm1342
  %v1344 = vsel %vm1343, %v1335, %v1340
  %v1345 = vrsqrt.pop %v948
  %v1346 = vmul.f32 %v1345, %v948
  %v1347 = vmul.f32 %v1346, %v1345
  %v1348 = vmul.f32 0.5, %v1347
  %v1349 = vsub.f32 1.5, %v1348
  %v1350 = vmul.f32 %v1345, %v1349
  %vm1351 = vweird.f32 %v948
  %vm1352 = vweird.f32 %v1345
  %vm1353 = vmor %vm1351, %vm1352
  %v1354 = vsel %vm1353, %v1345, %v1350
  %v1355 = vrsqrt.pop %v949
  %v1356 = vmul.f32 %v1355, %v949
  %v1357 = vmul.f32 %v1356, %v1355
  %v1358 = vmul.f32 0.5, %v1357
  %v1359 = vsub.f32 1.5, %v1358
  %v1360 = vmul.f32 %v1355, %v1359
  %vm1361 = vweird.f32 %v949
  %vm1362 = vweird.f32 %v1355
  %vm1363 = vmor %vm1361, %vm1362
  %v1364 = vsel %vm1363, %v1355, %v1360
  %v1365 = vrsqrt.pop %v950
  %v1366 = vmul.f32 %v1365, %v950
  %v1367 = vmul.f32 %v1366, %v1365
  %v1368 = vmul.f32 0.5, %v1367
  %v1369 = vsub.f32 1.5, %v1368
  %v1370 = vmul.f32 %v1365, %v1369
  %vm1371 = vweird.f32 %v950
  %vm1372 = vweird.f32 %v1365
  %vm1373 = vmor %vm1371, %vm1372
  %v1374 = vsel %vm1373, %v1365, %v1370
  %v1375 = vrsqrt.pop %v951
  %v1376 = vmul.f32 %v1375, %v951
  %v1377 = vmul.f32 %v1376, %v1375
  %v1378 = vmul.f32 0.5, %v1377
  %v1379 = vsub.f32 1.5, %v1378
  %v1380 = vmul.f32 %v1375, %v1379
  %vm1381 = vweird.f32 %v951
  %vm1382 = vweird.f32 %v1375
  %vm1383 = vmor %vm1381, %vm1382
  %v1384 = vsel %vm1383, %v1375, %v1380
  %v1385 = vrsqrt.pop %v952
  %v1386 = vmul.f32 %v1385, %v952
  %v1387 = vmul.f32 %v1386, %v1385
  %v1388 = vmul.f32 0.5, %v1387
  %v1389 = vsub.f32 1.5, %v1388
  %v1390 = vmul.f32 %v1385, %v1389
  %vm1391 = vweird.f32 %v952
  %vm1392 = vweird.f32 %v1385
  %vm1393 = vmor %vm1391, %vm1392
  %v1394 = vsel %vm1393, %v1385, %v1390
  %v1395 = vrsqrt.pop %v953
  %v1396 = vmul.f32 %v1395, %v953
  %v1397 = vmul.f32 %v1396, %v1395
  %v1398 = vmul.f32 0.5, %v1397
  %v1399 = vsub.f32 1.5, %v1398
  %v1400 = vmul.f32 %v1395, %v1399
  %vm1401 = vweird.f32 %v953
  %vm1402 = vweird.f32 %v1395
  %vm1403 = vmor %vm1401, %vm1402
  %v1404 = vsel %vm1403, %v1395, %v1400
  %v1405 = vrsqrt.pop %v954
  %v1406 = vmul.f32 %v1405, %v954
  %v1407 = vmul.f32 %v1406, %v1405
  %v1408 = vmul.f32 0.5, %v1407
  %v1409 = vsub.f32 1.5, %v1408
  %v1410 = vmul.f32 %v1405, %v1409
  %vm1411 = vweird.f32 %v954
  %vm1412 = vweird.f32 %v1405
  %vm1413 = vmor %vm1411, %vm1412
  %v1414 = vsel %vm1413, %v1405, %v1410
  %v1415 = vrsqrt.pop %v955
  %v1416 = vmul.f32 %v1415, %v955
  %v1417 = vmul.f32 %v1416, %v1415
  %v1418 = vmul.f32 0.5, %v1417
  %v1419 = vsub.f32 1.5, %v1418
  %v1420 = vmul.f32 %v1415, %v1419
  %vm1421 = vweird.f32 %v955
  %vm1422 = vweird.f32 %v1415
  %vm1423 = vmor %vm1421, %vm1422
  %v1424 = vsel %vm1423, %v1415, %v1420
  %v1425 = vrsqrt.pop %v956
  %v1426 = vmul.f32 %v1425, %v956
  %v1427 = vmul.f32 %v1426, %v1425
  %v1428 = vmul.f32 0.5, %v1427
  %v1429 = vsub.f32 1.5, %v1428
  %v1430 = vmul.f32 %v1425, %v1429
  %vm1431 = vweird.f32 %v956
  %vm1432 = vweird.f32 %v1425
  %vm1433 = vmor %vm1431, %vm1432
  %v1434 = vsel %vm1433, %v1425, %v1430
  %v1435 = vrsqrt.pop %v957
  %v1436 = vmul.f32 %v1435, %v957
  %v1437 = vmul.f32 %v1436, %v1435
  %v1438 = vmul.f32 0.5, %v1437
  %v1439 = vsub.f32 1.5, %v1438
  %v1440 = vmul.f32 %v1435, %v1439
  %vm1441 = vweird.f32 %v957
  %vm1442 = vweird.f32 %v1435
  %vm1443 = vmor %vm1441, %vm1442
  %v1444 = vsel %vm1443, %v1435, %v1440
  %v1445 = vrsqrt.pop %v958
  %v1446 = vmul.f32 %v1445, %v958
  %v1447 = vmul.f32 %v1446, %v1445
  %v1448 = vmul.f32 0.5, %v1447
  %v1449 = vsub.f32 1.5, %v1448
  %v1450 = vmul.f32 %v1445, %v1449
  %vm1451 = vweird.f32 %v958
  %vm1452 = vweird.f32 %v1445
  %vm1453 = vmor %vm1451, %vm1452
  %v1454 = vsel %vm1453, %v1445, %v1450
  %v1455 = vrsqrt.pop %v959
  %v1456 = vmul.f32 %v1455, %v959
  %v1457 = vmul.f32 %v1456, %v1455
  %v1458 = vmul.f32 0.5, %v1457
  %v1459 = vsub.f32 1.5, %v1458
  %v1460 = vmul.f32 %v1455, %v1459
  %vm1461 = vweird.f32 %v959
  %vm1462 = vweird.f32 %v1455
  %vm1463 = vmor %vm1461, %vm1462
  %v1464 = vsel %vm1463, %v1455, %v1460
  %v1465 = vrsqrt.pop %v960
  %v1466 = vmul.f32 %v1465, %v960
  %v1467 = vmul.f32 %v1466, %v1465
  %v1468 = vmul.f32 0.5, %v1467
  %v1469 = vsub.f32 1.5, %v1468
  %v1470 = vmul.f32 %v1465, %v1469
  %vm1471 = vweird.f32 %v960
  %vm1472 = vweird.f32 %v1465
  %vm1473 = vmor %vm1471, %vm1472
  %v1474 = vsel %vm1473, %v1465, %v1470
  %v1475 = vrsqrt.pop %v961
  %v1476 = vmul.f32 %v1475, %v961
  %v1477 = vmul.f32 %v1476, %v1475
  %v1478 = vmul.f32 0.5, %v1477
  %v1479 = vsub.f32 1.5, %v1478
  %v1480 = vmul.f32 %v1475, %v1479
  %vm1481 = vweird.f32 %v961
  %vm1482 = vweird.f32 %v1475
  %vm1483 = vmor %vm1481, %vm1482
  %v1484 = vsel %vm1483, %v1475, %v1480
  %v1485 = vrsqrt.pop %v962
  %v1486 = vmul.f32 %v1485, %v962
  %v1487 = vmul.f32 %v1486, %v1485
  %v1488 = vmul.f32 0.5, %v1487
  %v1489 = vsub.f32 1.5, %v1488
  %v1490 = vmul.f32 %v1485, %v1489
  %vm1491 = vweird.f32 %v962
  %vm1492 = vweird.f32 %v1485
  %vm1493 = vmor %vm1491, %vm1492
  %v1494 = vsel %vm1493, %v1485, %v1490
  %v1495 = vrsqrt.pop %v963
  %v1496 = vmul.f32 %v1495, %v963
  %v1497 = vmul.f32 %v1496, %v1495
  %v1498 = vmul.f32 0.5, %v1497
  %v1499 = vsub.f32 1.5, %v1498
  %v1500 = vmul.f32 %v1495, %v1499
  %vm1501 = vweird.f32 %v963
  %vm1502 = vweird.f32 %v1495
  %vm1503 = vmor %vm1501, %vm1502
  %v1504 = vsel %vm1503, %v1495, %v1500
  %v1505 = vrsqrt.pop %v964
  %v1506 = vmul.f32 %v1505, %v964
  %v1507 = vmul.f32 %v1506, %v1505
  %v1508 = vmul.f32 0.5, %v1507
  %v1509 = vsub.f32 1.5, %v1508
  %v1510 = vmul.f32 %v1505, %v1509
  %vm1511 = vweird.f32 %v964
  %vm1512 = vweird.f32 %v1505
  %vm1513 = vmor %vm1511, %vm1512
  %v1514 = vsel %vm1513, %v1505, %v1510
  %v1515 = vrsqrt.pop %v965
  %v1516 = vmul.f32 %v1515, %v965
  %v1517 = vmul.f32 %v1516, %v1515
  %v1518 = vmul.f32 0.5, %v1517
  %v1519 = vsub.f32 1.5, %v1518
  %v1520 = vmul.f32 %v1515, %v1519
  %vm1521 = vweird.f32 %v965
  %vm1522 = vweird.f32 %v1515
  %vm1523 = vmor %vm1521, %vm1522
  %v1524 = vsel %vm1523, %v1515, %v1520
  %v1525 = vrsqrt.pop %v966
  %v1526 = vmul.f32 %v1525, %v966
  %v1527 = vmul.f32 %v1526, %v1525
  %v1528 = vmul.f32 0.5, %v1527
  %v1529 = vsub.f32 1.5, %v1528
  %v1530 = vmul.f32 %v1525, %v1529
  %vm1531 = vweird.f32 %v966
  %vm1532 = vweird.f32 %v1525
  %vm1533 = vmor %vm1531, %vm1532
  %v1534 = vsel %vm1533, %v1525, %v1530
  %v1535 = vrsqrt.pop %v967
  %v1536 = vmul.f32 %v1535, %v967
  %v1537 = vmul.f32 %v1536, %v1535
  %v1538 = vmul.f32 0.5, %v1537
  %v1539 = vsub.f32 1.5, %v1538
  %v1540 = vmul.f32 %v1535, %v1539
  %vm1541 = vweird.f32 %v967
  %vm1542 = vweird.f32 %v1535
  %vm1543 = vmor %vm1541, %vm1542
  %v1544 = vsel %vm1543, %v1535, %v1540
  %v1545 = vrsqrt.pop %v968
  %v1546 = vmul.f32 %v1545, %v968
  %v1547 = vmul.f32 %v1546, %v1545
  %v1548 = vmul.f32 0.5, %v1547
  %v1549 = vsub.f32 1.5, %v1548
  %v1550 = vmul.f32 %v1545, %v1549
  %vm1551 = vweird.f32 %v968
  %vm1552 = vweird.f32 %v1545
  %vm1553 = vmor %vm1551, %vm1552
  %v1554 = vsel %vm1553, %v1545, %v1550
  %v1555 = vrsqrt.pop %v969
  %v1556 = vmul.f32 %v1555, %v969
  %v1557 = vmul.f32 %v1556, %v1555
  %v1558 = vmul.f32 0.5, %v1557
  %v1559 = vsub.f32 1.5, %v1558
  %v1560 = vmul.f32 %v1555, %v1559
  %vm1561 = vweird.f32 %v969
  %vm1562 = vweird.f32 %v1555
  %vm1563 = vmor %vm1561, %vm1562
  %v1564 = vsel %vm1563, %v1555, %v1560
  %v1565 = vrsqrt.pop %v970
  %v1566 = vmul.f32 %v1565, %v970
  %v1567 = vmul.f32 %v1566, %v1565
  %v1568 = vmul.f32 0.5, %v1567
  %v1569 = vsub.f32 1.5, %v1568
  %v1570 = vmul.f32 %v1565, %v1569
  %vm1571 = vweird.f32 %v970
  %vm1572 = vweird.f32 %v1565
  %vm1573 = vmor %vm1571, %vm1572
  %v1574 = vsel %vm1573, %v1565, %v1570
  %v1575 = vrsqrt.pop %v971
  %v1576 = vmul.f32 %v1575, %v971
  %v1577 = vmul.f32 %v1576, %v1575
  %v1578 = vmul.f32 0.5, %v1577
  %v1579 = vsub.f32 1.5, %v1578
  %v1580 = vmul.f32 %v1575, %v1579
  %vm1581 = vweird.f32 %v971
  %vm1582 = vweird.f32 %v1575
  %vm1583 = vmor %vm1581, %vm1582
  %v1584 = vsel %vm1583, %v1575, %v1580
  %v1585 = vrsqrt.pop %v972
  %v1586 = vmul.f32 %v1585, %v972
  %v1587 = vmul.f32 %v1586, %v1585
  %v1588 = vmul.f32 0.5, %v1587
  %v1589 = vsub.f32 1.5, %v1588
  %v1590 = vmul.f32 %v1585, %v1589
  %vm1591 = vweird.f32 %v972
  %vm1592 = vweird.f32 %v1585
  %vm1593 = vmor %vm1591, %vm1592
  %v1594 = vsel %vm1593, %v1585, %v1590
  %v1595 = vrsqrt.pop %v973
  %v1596 = vmul.f32 %v1595, %v973
  %v1597 = vmul.f32 %v1596, %v1595
  %v1598 = vmul.f32 0.5, %v1597
  %v1599 = vsub.f32 1.5, %v1598
  %v1600 = vmul.f32 %v1595, %v1599
  %vm1601 = vweird.f32 %v973
  %vm1602 = vweird.f32 %v1595
  %vm1603 = vmor %vm1601, %vm1602
  %v1604 = vsel %vm1603, %v1595, %v1600
  %v1605 = vrsqrt.pop %v974
  %v1606 = vmul.f32 %v1605, %v974
  %v1607 = vmul.f32 %v1606, %v1605
  %v1608 = vmul.f32 0.5, %v1607
  %v1609 = vsub.f32 1.5, %v1608
  %v1610 = vmul.f32 %v1605, %v1609
  %vm1611 = vweird.f32 %v974
  %vm1612 = vweird.f32 %v1605
  %vm1613 = vmor %vm1611, %vm1612
  %v1614 = vsel %vm1613, %v1605, %v1610
  %v1615 = vmul.f32 %v847, %v984
  %v1616 = vmul.f32 %v848, %v994
  %v1617 = vmul.f32 %v849, %v1004
  %v1618 = vmul.f32 %v850, %v1014
  %v1619 = vmul.f32 %v851, %v1024
  %v1620 = vmul.f32 %v852, %v1034
  %v1621 = vmul.f32 %v853, %v1044
  %v1622 = vmul.f32 %v854, %v1054
  %v1623 = vmul.f32 %v855, %v1064
  %v1624 = vmul.f32 %v856, %v1074
  %v1625 = vmul.f32 %v857, %v1084
  %v1626 = vmul.f32 %v858, %v1094
  %v1627 = vmul.f32 %v859, %v1104
  %v1628 = vmul.f32 %v860, %v1114
  %v1629 = vmul.f32 %v861, %v1124
  %v1630 = vmul.f32 %v862, %v1134
  %v1631 = vmul.f32 %v863, %v1144
  %v1632 = vmul.f32 %v864, %v1154
  %v1633 = vmul.f32 %v865, %v1164
  %v1634 = vmul.f32 %v866, %v1174
  %v1635 = vmul.f32 %v867, %v1184
  %v1636 = vmul.f32 %v868, %v1194
  %v1637 = vmul.f32 %v869, %v1204
  %v1638 = vmul.f32 %v870, %v1214
  %v1639 = vmul.f32 %v871, %v1224
  %v1640 = vmul.f32 %v872, %v1234
  %v1641 = vmul.f32 %v873, %v1244
  %v1642 = vmul.f32 %v874, %v1254
  %v1643 = vmul.f32 %v875, %v1264
  %v1644 = vmul.f32 %v876, %v1274
  %v1645 = vmul.f32 %v877, %v1284
  %v1646 = vmul.f32 %v878, %v1294
  %v1647 = vmul.f32 %v879, %v1304
  %v1648 = vmul.f32 %v880, %v1314
  %v1649 = vmul.f32 %v881, %v1324
  %v1650 = vmul.f32 %v882, %v1334
  %v1651 = vmul.f32 %v883, %v1344
  %v1652 = vmul.f32 %v884, %v1354
  %v1653 = vmul.f32 %v885, %v1364
  %v1654 = vmul.f32 %v886, %v1374
  %v1655 = vmul.f32 %v887, %v1384
  %v1656 = vmul.f32 %v888, %v1394
  %v1657 = vmul.f32 %v889, %v1404
  %v1658 = vmul.f32 %v890, %v1414
  %v1659 = vmul.f32 %v891, %v1424
  %v1660 = vmul.f32 %v892, %v1434
  %v1661 = vmul.f32 %v893, %v1444
  %v1662 = vmul.f32 %v894, %v1454
  %v1663 = vmul.f32 %v895, %v1464
  %v1664 = vmul.f32 %v896, %v1474
  %v1665 = vmul.f32 %v897, %v1484
  %v1666 = vmul.f32 %v898, %v1494
  %v1667 = vmul.f32 %v899, %v1504
  %v1668 = vmul.f32 %v900, %v1514
  %v1669 = vmul.f32 %v901, %v1524
  %v1670 = vmul.f32 %v902, %v1534
  %v1671 = vmul.f32 %v903, %v1544
  %v1672 = vmul.f32 %v904, %v1554
  %v1673 = vmul.f32 %v905, %v1564
  %v1674 = vmul.f32 %v906, %v1574
  %v1675 = vmul.f32 %v907, %v1584
  %v1676 = vmul.f32 %v908, %v1594
  %v1677 = vmul.f32 %v909, %v1604
  %v1678 = vmul.f32 %v910, %v1614
  %v1679 = vld [vmem:[%s1] sm:$0x1]
  %v1681 = vperm.slane %v1679, 0
  %v1683 = vmul.f32 %v1615, %v1681
  %v1684 = vmul.f32 %v1616, %v1681
  %v1685 = vmul.f32 %v1617, %v1681
  %v1686 = vmul.f32 %v1618, %v1681
  %v1687 = vmul.f32 %v1619, %v1681
  %v1688 = vmul.f32 %v1620, %v1681
  %v1689 = vmul.f32 %v1621, %v1681
  %v1690 = vmul.f32 %v1622, %v1681
  %v1691 = vmul.f32 %v1623, %v1681
  %v1692 = vmul.f32 %v1624, %v1681
  %v1693 = vmul.f32 %v1625, %v1681
  %v1694 = vmul.f32 %v1626, %v1681
  %v1695 = vmul.f32 %v1627, %v1681
  %v1696 = vmul.f32 %v1628, %v1681
  %v1697 = vmul.f32 %v1629, %v1681
  %v1698 = vmul.f32 %v1630, %v1681
  %v1699 = vmul.f32 %v1631, %v1681
  %v1700 = vmul.f32 %v1632, %v1681
  %v1701 = vmul.f32 %v1633, %v1681
  %v1702 = vmul.f32 %v1634, %v1681
  %v1703 = vmul.f32 %v1635, %v1681
  %v1704 = vmul.f32 %v1636, %v1681
  %v1705 = vmul.f32 %v1637, %v1681
  %v1706 = vmul.f32 %v1638, %v1681
  %v1707 = vmul.f32 %v1639, %v1681
  %v1708 = vmul.f32 %v1640, %v1681
  %v1709 = vmul.f32 %v1641, %v1681
  %v1710 = vmul.f32 %v1642, %v1681
  %v1711 = vmul.f32 %v1643, %v1681
  %v1712 = vmul.f32 %v1644, %v1681
  %v1713 = vmul.f32 %v1645, %v1681
  %v1714 = vmul.f32 %v1646, %v1681
  %v1715 = vmul.f32 %v1647, %v1681
  %v1716 = vmul.f32 %v1648, %v1681
  %v1717 = vmul.f32 %v1649, %v1681
  %v1718 = vmul.f32 %v1650, %v1681
  %v1719 = vmul.f32 %v1651, %v1681
  %v1720 = vmul.f32 %v1652, %v1681
  %v1721 = vmul.f32 %v1653, %v1681
  %v1722 = vmul.f32 %v1654, %v1681
  %v1723 = vmul.f32 %v1655, %v1681
  %v1724 = vmul.f32 %v1656, %v1681
  %v1725 = vmul.f32 %v1657, %v1681
  %v1726 = vmul.f32 %v1658, %v1681
  %v1727 = vmul.f32 %v1659, %v1681
  %v1728 = vmul.f32 %v1660, %v1681
  %v1729 = vmul.f32 %v1661, %v1681
  %v1730 = vmul.f32 %v1662, %v1681
  %v1731 = vmul.f32 %v1663, %v1681
  %v1732 = vmul.f32 %v1664, %v1681
  %v1733 = vmul.f32 %v1665, %v1681
  %v1734 = vmul.f32 %v1666, %v1681
  %v1735 = vmul.f32 %v1667, %v1681
  %v1736 = vmul.f32 %v1668, %v1681
  %v1737 = vmul.f32 %v1669, %v1681
  %v1738 = vmul.f32 %v1670, %v1681
  %v1739 = vmul.f32 %v1671, %v1681
  %v1740 = vmul.f32 %v1672, %v1681
  %v1741 = vmul.f32 %v1673, %v1681
  %v1742 = vmul.f32 %v1674, %v1681
  %v1743 = vmul.f32 %v1675, %v1681
  %v1744 = vmul.f32 %v1676, %v1681
  %v1745 = vmul.f32 %v1677, %v1681
  %v1746 = vmul.f32 %v1678, %v1681
  %v1747 = vld [vmem:[%s2] sm:$0x1]
  %v1749 = vperm.slane %v1747, 0
  %v1751 = vadd.f32 %v1683, %v1749
  %v1752 = vadd.f32 %v1684, %v1749
  %v1753 = vadd.f32 %v1685, %v1749
  %v1754 = vadd.f32 %v1686, %v1749
  %v1755 = vadd.f32 %v1687, %v1749
  %v1756 = vadd.f32 %v1688, %v1749
  %v1757 = vadd.f32 %v1689, %v1749
  %v1758 = vadd.f32 %v1690, %v1749
  %v1759 = vadd.f32 %v1691, %v1749
  %v1760 = vadd.f32 %v1692, %v1749
  %v1761 = vadd.f32 %v1693, %v1749
  %v1762 = vadd.f32 %v1694, %v1749
  %v1763 = vadd.f32 %v1695, %v1749
  %v1764 = vadd.f32 %v1696, %v1749
  %v1765 = vadd.f32 %v1697, %v1749
  %v1766 = vadd.f32 %v1698, %v1749
  %v1767 = vadd.f32 %v1699, %v1749
  %v1768 = vadd.f32 %v1700, %v1749
  %v1769 = vadd.f32 %v1701, %v1749
  %v1770 = vadd.f32 %v1702, %v1749
  %v1771 = vadd.f32 %v1703, %v1749
  %v1772 = vadd.f32 %v1704, %v1749
  %v1773 = vadd.f32 %v1705, %v1749
  %v1774 = vadd.f32 %v1706, %v1749
  %v1775 = vadd.f32 %v1707, %v1749
  %v1776 = vadd.f32 %v1708, %v1749
  %v1777 = vadd.f32 %v1709, %v1749
  %v1778 = vadd.f32 %v1710, %v1749
  %v1779 = vadd.f32 %v1711, %v1749
  %v1780 = vadd.f32 %v1712, %v1749
  %v1781 = vadd.f32 %v1713, %v1749
  %v1782 = vadd.f32 %v1714, %v1749
  %v1783 = vadd.f32 %v1715, %v1749
  %v1784 = vadd.f32 %v1716, %v1749
  %v1785 = vadd.f32 %v1717, %v1749
  %v1786 = vadd.f32 %v1718, %v1749
  %v1787 = vadd.f32 %v1719, %v1749
  %v1788 = vadd.f32 %v1720, %v1749
  %v1789 = vadd.f32 %v1721, %v1749
  %v1790 = vadd.f32 %v1722, %v1749
  %v1791 = vadd.f32 %v1723, %v1749
  %v1792 = vadd.f32 %v1724, %v1749
  %v1793 = vadd.f32 %v1725, %v1749
  %v1794 = vadd.f32 %v1726, %v1749
  %v1795 = vadd.f32 %v1727, %v1749
  %v1796 = vadd.f32 %v1728, %v1749
  %v1797 = vadd.f32 %v1729, %v1749
  %v1798 = vadd.f32 %v1730, %v1749
  %v1799 = vadd.f32 %v1731, %v1749
  %v1800 = vadd.f32 %v1732, %v1749
  %v1801 = vadd.f32 %v1733, %v1749
  %v1802 = vadd.f32 %v1734, %v1749
  %v1803 = vadd.f32 %v1735, %v1749
  %v1804 = vadd.f32 %v1736, %v1749
  %v1805 = vadd.f32 %v1737, %v1749
  %v1806 = vadd.f32 %v1738, %v1749
  %v1807 = vadd.f32 %v1739, %v1749
  %v1808 = vadd.f32 %v1740, %v1749
  %v1809 = vadd.f32 %v1741, %v1749
  %v1810 = vadd.f32 %v1742, %v1749
  %v1811 = vadd.f32 %v1743, %v1749
  %v1812 = vadd.f32 %v1744, %v1749
  %v1813 = vadd.f32 %v1745, %v1749
  %v1814 = vadd.f32 %v1746, %v1749
  %1815 = vst.msk [vmem:[%s3] sm:$0xff] %vm78, %v1751
  %1816 = vst.msk [vmem:[%s3 + $0x8] sm:$0xff] %vm78, %v1752
  %1817 = vst.msk [vmem:[%s3 + $0x10] sm:$0xff] %vm78, %v1753
  %1818 = vst.msk [vmem:[%s3 + $0x18] sm:$0xff] %vm78, %v1754
  %1819 = vst.msk [vmem:[%s3 + $0x20] sm:$0xff] %vm78, %v1755
  %1820 = vst.msk [vmem:[%s3 + $0x28] sm:$0xff] %vm78, %v1756
  %1821 = vst.msk [vmem:[%s3 + $0x30] sm:$0xff] %vm78, %v1757
  %1822 = vst.msk [vmem:[%s3 + $0x38] sm:$0xff] %vm78, %v1758
  %1823 = vst.msk [vmem:[%s3 + $0x40] sm:$0xff] %vm78, %v1759
  %1824 = vst.msk [vmem:[%s3 + $0x48] sm:$0xff] %vm78, %v1760
  %1825 = vst.msk [vmem:[%s3 + $0x50] sm:$0xff] %vm78, %v1761
  %1826 = vst.msk [vmem:[%s3 + $0x58] sm:$0xff] %vm78, %v1762
  %1827 = vst.msk [vmem:[%s3 + $0x60] sm:$0xff] %vm78, %v1763
  %1828 = vst.msk [vmem:[%s3 + $0x68] sm:$0xff] %vm78, %v1764
  %1829 = vst.msk [vmem:[%s3 + $0x70] sm:$0xff] %vm78, %v1765
  %1830 = vst.msk [vmem:[%s3 + $0x78] sm:$0xff] %vm78, %v1766
  %1831 = vst.msk [vmem:[%s3 + $0x80] sm:$0xff] %vm78, %v1767
  %1832 = vst.msk [vmem:[%s3 + $0x88] sm:$0xff] %vm78, %v1768
  %1833 = vst.msk [vmem:[%s3 + $0x90] sm:$0xff] %vm78, %v1769
  %1834 = vst.msk [vmem:[%s3 + $0x98] sm:$0xff] %vm78, %v1770
  %1835 = vst.msk [vmem:[%s3 + $0xa0] sm:$0xff] %vm78, %v1771
  %1836 = vst.msk [vmem:[%s3 + $0xa8] sm:$0xff] %vm78, %v1772
  %1837 = vst.msk [vmem:[%s3 + $0xb0] sm:$0xff] %vm78, %v1773
  %1838 = vst.msk [vmem:[%s3 + $0xb8] sm:$0xff] %vm78, %v1774
  %1839 = vst.msk [vmem:[%s3 + $0xc0] sm:$0xff] %vm78, %v1775
  %1840 = vst.msk [vmem:[%s3 + $0xc8] sm:$0xff] %vm78, %v1776
  %1841 = vst.msk [vmem:[%s3 + $0xd0] sm:$0xff] %vm78, %v1777
  %1842 = vst.msk [vmem:[%s3 + $0xd8] sm:$0xff] %vm78, %v1778
  %1843 = vst.msk [vmem:[%s3 + $0xe0] sm:$0xff] %vm78, %v1779
  %1844 = vst.msk [vmem:[%s3 + $0xe8] sm:$0xff] %vm78, %v1780
  %1845 = vst.msk [vmem:[%s3 + $0xf0] sm:$0xff] %vm78, %v1781
  %1846 = vst.msk [vmem:[%s3 + $0xf8] sm:$0xff] %vm78, %v1782
  %1847 = vst.msk [vmem:[%s3 + $0x100] sm:$0xff] %vm78, %v1783
  %1848 = vst.msk [vmem:[%s3 + $0x108] sm:$0xff] %vm78, %v1784
  %1849 = vst.msk [vmem:[%s3 + $0x110] sm:$0xff] %vm78, %v1785
  %1850 = vst.msk [vmem:[%s3 + $0x118] sm:$0xff] %vm78, %v1786
  %1851 = vst.msk [vmem:[%s3 + $0x120] sm:$0xff] %vm78, %v1787
  %1852 = vst.msk [vmem:[%s3 + $0x128] sm:$0xff] %vm78, %v1788
  %1853 = vst.msk [vmem:[%s3 + $0x130] sm:$0xff] %vm78, %v1789
  %1854 = vst.msk [vmem:[%s3 + $0x138] sm:$0xff] %vm78, %v1790
  %1855 = vst.msk [vmem:[%s3 + $0x140] sm:$0xff] %vm78, %v1791
  %1856 = vst.msk [vmem:[%s3 + $0x148] sm:$0xff] %vm78, %v1792
  %1857 = vst.msk [vmem:[%s3 + $0x150] sm:$0xff] %vm78, %v1793
  %1858 = vst.msk [vmem:[%s3 + $0x158] sm:$0xff] %vm78, %v1794
  %1859 = vst.msk [vmem:[%s3 + $0x160] sm:$0xff] %vm78, %v1795
  %1860 = vst.msk [vmem:[%s3 + $0x168] sm:$0xff] %vm78, %v1796
  %1861 = vst.msk [vmem:[%s3 + $0x170] sm:$0xff] %vm78, %v1797
  %1862 = vst.msk [vmem:[%s3 + $0x178] sm:$0xff] %vm78, %v1798
  %1863 = vst.msk [vmem:[%s3 + $0x180] sm:$0xff] %vm78, %v1799
  %1864 = vst.msk [vmem:[%s3 + $0x188] sm:$0xff] %vm78, %v1800
  %1865 = vst.msk [vmem:[%s3 + $0x190] sm:$0xff] %vm78, %v1801
  %1866 = vst.msk [vmem:[%s3 + $0x198] sm:$0xff] %vm78, %v1802
  %1867 = vst.msk [vmem:[%s3 + $0x1a0] sm:$0xff] %vm78, %v1803
  %1868 = vst.msk [vmem:[%s3 + $0x1a8] sm:$0xff] %vm78, %v1804
  %1869 = vst.msk [vmem:[%s3 + $0x1b0] sm:$0xff] %vm78, %v1805
  %1870 = vst.msk [vmem:[%s3 + $0x1b8] sm:$0xff] %vm78, %v1806
  %1871 = vst.msk [vmem:[%s3 + $0x1c0] sm:$0xff] %vm78, %v1807
  %1872 = vst.msk [vmem:[%s3 + $0x1c8] sm:$0xff] %vm78, %v1808
  %1873 = vst.msk [vmem:[%s3 + $0x1d0] sm:$0xff] %vm78, %v1809
  %1874 = vst.msk [vmem:[%s3 + $0x1d8] sm:$0xff] %vm78, %v1810
  %1875 = vst.msk [vmem:[%s3 + $0x1e0] sm:$0xff] %vm78, %v1811
  %1876 = vst.msk [vmem:[%s3 + $0x1e8] sm:$0xff] %vm78, %v1812
  %1877 = vst.msk [vmem:[%s3 + $0x1f0] sm:$0xff] %vm78, %v1813
  %1878 = vst.msk [vmem:[%s3 + $0x1f8] sm:$0xff] %vm78, %v1814
  // Predicated region
  $region14: #{tpu_custom_call.1} parent=0 // pred_check
    _
  $region15: #{tpu_custom_call.1} parent=0 // pred_check_branch
    %1880 = sbr.rel (0) target = $region17
  $region16: #{tpu_custom_call.1} parent=0 // pred_region
    _
  $region17: #{tpu_custom_call.1} parent=0 // pred_fallthru
    _
  // Predicated region
  $region18: #{tpu_custom_call.1} parent=0 // pred_check
    _
  $region19: #{tpu_custom_call.1} parent=0 // pred_check_branch
    %1882 = sbr.rel (0) target = $region21
  $region20: #{tpu_custom_call.1} parent=0 // pred_region
    _
  $region21: #{tpu_custom_call.1} parent=0 // pred_fallthru
    _

</llo_original>
